<compile_context>
chip_gen: v6e
topology: v6e:2x2x1
jax: 0.10.0
libtpu: 0.0.40
codegen_flags: <defaults>
</compile_context>

<pallas_src>
from functools import partial

import jax
import jax.numpy as jnp
from jax import lax
from jax.experimental import pallas as pl
from jax.experimental.pallas import tpu as pltpu

N_GRAM = 4          # matches CiderD(n=4)
SIGMA = 6.0         # matches CiderD(sigma=6.0)
VOCAB = 2048        # hashed n-gram buckets per order (multiple of 128)
HASH_PRIME = 1000003
OUT_LANES = 128     # lane-dense output width


def _round_up(x, m):
    return ((x + m - 1) // m) * m


def _choose_tile_b(b):
    # Biggest image tile such that double-buffered bf16 inputs (2 arrays x
    # 2 buffers x TB*8192*2B = 16 MiB at TB=256) plus per-order f32
    # intermediates (~12 MiB) stay well inside VMEM on v5e/v6e/v7x.
    return min(256, _round_up(max(b, 1), 16))


# --------------------------------------------------------------------------
# Pallas kernel: CIDEr-D scores for one tile of TB images
# --------------------------------------------------------------------------
def _cider_kernel(hyp_ref, refc_ref, idf_ref, out_ref, *, sigma, n_orders, vocab):
    # hyp_ref / refc_ref : (TB, N*V) bf16 term frequencies for this image tile
    # idf_ref            : (1,  N*V) f32 idf weights (log(B) - log(max(1, df)))
    # out_ref            : (TB, 128) f32 per-image score broadcast across lanes
    tb = out_ref.shape[0]
    val = jnp.zeros((tb, 1), jnp.float32)
    len_h = jnp.zeros((tb, 1), jnp.float32)
    len_r = jnp.zeros((tb, 1), jnp.float32)

    # One n-gram order at a time: static 128-aligned lane slices of the VMEM
    # blocks keep every f32 intermediate at (TB, V) instead of (TB, N*V).
    for n in range(n_orders):
        lo = n * vocab
        hi = lo + vocab
        h = hyp_ref[:, lo:hi].astype(jnp.float32)    # raw tf
        r = refc_ref[:, lo:hi].astype(jnp.float32)
        w = idf_ref[:, lo:hi]                        # (1, V), broadcast

        vh = h * w                                   # tf-idf vectors
        vr = r * w
        # CIDEr-D numerator: candidate tf-idf clipped to reference tf-idf
        num = jnp.sum(jnp.minimum(vh, vr) * vr, axis=-1, keepdims=True)   # (TB,1)
        nh = jnp.sum(vh * vh, axis=-1, keepdims=True)
        nr = jnp.sum(vr * vr, axis=-1, keepdims=True)

        prod = nh * nr
        inv = lax.rsqrt(jnp.maximum(prod, 1e-18))    # EUP; == 1/(|vh|*|vr|)
        val = val + jnp.where(prod > 0.0, num * inv, jnp.zeros_like(num))

        if n == 1:
            # Reference ciderD_scorer uses the total *bigram* term frequency as
            # the sentence "length" for the Gaussian penalty (counts2vec: n==1).
            len_h = jnp.sum(h, axis=-1, keepdims=True)
            len_r = jnp.sum(r, axis=-1, keepdims=True)

    delta = len_h - len_r
    penalty = jnp.exp(-(delta * delta) / (2.0 * sigma * sigma))

    # single reference per image (as in CiderD.forward); score = 10 * mean_n
    score = (10.0 / float(n_orders)) * val * penalty          # (TB, 1)
    out_ref[...] = jnp.broadcast_to(score, out_ref.shape)     # lane-dense store


def cider_d_pallas(hyp_counts, ref_counts, idf, sigma=SIGMA,
                   n_max=N_GRAM, vocab=VOCAB):
    """Returns (corpus_score, per_image_scores) like CiderD.forward.

    hyp_counts / ref_counts : [B, n_max*vocab] float counts (flat layout)
    idf                     : [n_max*vocab] f32 idf weights
    """
    B, F = hyp_counts.shape
    assert F == n_max * vocab

    TB = _choose_tile_b(B)
    B_pad = _round_up(B, TB)
    if B_pad != B:
        pad = ((0, B_pad - B), (0, 0))
        hyp_counts = jnp.pad(hyp_counts, pad)
        ref_counts = jnp.pad(ref_counts, pad)

    # bf16 in HBM (counts are small integers -> exact), f32 math in-kernel.
    hyp_bf = hyp_counts.astype(jnp.bfloat16)
    ref_bf = ref_counts.astype(jnp.bfloat16)
    idf2d = idf.reshape(1, F).astype(jnp.float32)

    kernel = partial(_cider_kernel, sigma=float(sigma),
                     n_orders=int(n_max), vocab=int(vocab))

    cost = pl.CostEstimate(
        flops=int(10 * B_pad * F),
        transcendentals=int((n_max + 1) * B_pad),
        bytes_accessed=int(2 * B_pad * F * 2 + F * 4 + B_pad * OUT_LANES * 4),
    )

    out = pl.pallas_call(
        kernel,
        out_shape=jax.ShapeDtypeStruct((B_pad, OUT_LANES), jnp.float32),
        grid=(B_pad // TB,),
        in_specs=[
            pl.BlockSpec((TB, F), lambda t: (t, 0)),
            pl.BlockSpec((TB, F), lambda t: (t, 0)),
            pl.BlockSpec((1, F), lambda t: (0, 0)),   # constant block: no re-DMA
        ],
        out_specs=pl.BlockSpec((TB, OUT_LANES), lambda t: (t, 0)),
        compiler_params=pltpu.CompilerParams(
            dimension_semantics=("parallel",),
            vmem_limit_bytes=48 * 1024 * 1024,
        ),
        cost_estimate=cost,
    )(hyp_bf, ref_bf, idf2d)

    scores = out[:B, 0]
    return jnp.mean(scores), scores


# --------------------------------------------------------------------------
# Glue (plain JAX): hashed n-gram counts (scatter-add), document frequency, idf
# --------------------------------------------------------------------------
def ngram_counts(tokens, lengths, n_max=N_GRAM, vocab=VOCAB):
    """tokens: [B, L] int32, lengths: [B] int32 -> counts [B, n_max*vocab] f32."""
    B, L = tokens.shape
    per_order = []
    for n in range(1, n_max + 1):
        W = L - n + 1
        h = tokens[:, :W].astype(jnp.uint32)
        for k in range(1, n):
            h = h * jnp.uint32(HASH_PRIME) + tokens[:, k:W + k].astype(jnp.uint32)
        bucket = (h % jnp.uint32(vocab)).astype(jnp.int32)                 # [B, W]
        valid = ((jnp.arange(W)[None, :] + n) <= lengths[:, None])         # [B, W]
        rows = jnp.broadcast_to(jnp.arange(B)[:, None], (B, W))
        counts = jnp.zeros((B, vocab), jnp.float32).at[rows, bucket].add(
            valid.astype(jnp.float32))                                     # [B, V]
        per_order.append(counts)
    return jnp.concatenate(per_order, axis=1)                              # [B, n_max*V]


def compute_idf(ref_counts_flat):
    """Document frequency / idf over the reference corpus (one ref per image)."""
    B = ref_counts_flat.shape[0]
    df = jnp.sum((ref_counts_flat > 0).astype(jnp.float32), axis=0)        # [n_max*V]
    ref_len = jnp.log(jnp.float32(B))
    return ref_len - jnp.log(jnp.maximum(df, 1.0))


def cider_d_forward(gts_tokens, gts_lengths, res_tokens, res_lengths):
    """Equivalent of CiderD().forward(gts, res) on tokenized integer sequences."""
    ref_counts = ngram_counts(gts_tokens, gts_lengths)
    hyp_counts = ngram_counts(res_tokens, res_lengths)
    idf = compute_idf(ref_counts)
    return cider_d_pallas(hyp_counts, ref_counts, idf, sigma=SIGMA)


# --------------------------------------------------------------------------
if __name__ == "__main__":
    key = jax.random.PRNGKey(0)
    B, L, TOK_VOCAB = 4, 8, 20

    k1, k2, _ = jax.random.split(key, 3)
    gts_tokens = jax.random.randint(k1, (B, L), 1, TOK_VOCAB, dtype=jnp.int32)
    res_tokens = jax.random.randint(k2, (B, L), 1, TOK_VOCAB, dtype=jnp.int32)
    # make a couple of hypotheses partially copy their reference (non-trivial scores)
    res_tokens = res_tokens.at[0, :5].set(gts_tokens[0, :5])
    res_tokens = res_tokens.at[2, :].set(gts_tokens[2, :])
    gts_lengths = jnp.array([8, 7, 8, 6], dtype=jnp.int32)
    res_lengths = jnp.array([8, 8, 8, 5], dtype=jnp.int32)

    score, scores = jax.jit(cider_d_forward)(
        gts_tokens, gts_lengths, res_tokens, res_lengths
    )
    jax.block_until_ready((score, scores))
    print("KERNEL_OK")
</pallas_src>

<mosaic_0001>
module attributes {stable_mosaic.version = 11 : i64} {
  func.func private @main(%arg0: i32) attributes {dimension_semantics = [#tpu.dimension_semantics<core_parallel>], iteration_bounds = array<i64: 2>, tpu.core_type = #tpu.core_type<sc_scalar_subcore>, window_params = []} {
    return
  }
}

module attributes {stable_mosaic.version = 11 : i64} {
  func.func private @main(%arg0: i32) attributes {dimension_semantics = [#tpu.dimension_semantics<core_parallel>], iteration_bounds = array<i64: 2>, tpu.core_type = #tpu.core_type<sc_scalar_subcore>, window_params = []} {
    return
  }
}

module attributes {stable_mosaic.version = 11 : i64} {
  func.func @_cider_kernel(%arg0: i32, %arg1: memref<16x8192xbf16, #tpu.memory_space<vmem>>, %arg2: memref<16x8192xbf16, #tpu.memory_space<vmem>>, %arg3: memref<1x8192xf32, #tpu.memory_space<vmem>>, %arg4: memref<16x128xf32, #tpu.memory_space<vmem>>) attributes {dimension_semantics = [#tpu.dimension_semantics<parallel>], iteration_bounds = array<i64: 1>, scalar_prefetch = 0 : i64, scratch_operands = 0 : i64, tpu.core_type = #tpu.core_type<tc>, window_params = [{transform_indices = @transform_0, window_bounds = array<i64: 16, 8192>}, {transform_indices = @transform_1, window_bounds = array<i64: 16, 8192>}, {pipeline_mode = #tpu.pipeline_mode<synchronous>, transform_indices = @transform_2, window_bounds = array<i64: 1, 8192>}, {transform_indices = @transform_3, window_bounds = array<i64: 16, 128>}]} {
    %cst = arith.constant 0.000000e+00 : f32
    %0 = vector.broadcast %cst : f32 to vector<16x1xf32>
    %c0 = arith.constant 0 : index
    %c0_0 = arith.constant 0 : index
    %1 = vector.load %arg1[%c0, %c0_0] : memref<16x8192xbf16, #tpu.memory_space<vmem>>, vector<16x2048xbf16>
    %2 = arith.extf %1 : vector<16x2048xbf16> to vector<16x2048xf32>
    %c0_1 = arith.constant 0 : index
    %c0_2 = arith.constant 0 : index
    %3 = vector.load %arg2[%c0_1, %c0_2] : memref<16x8192xbf16, #tpu.memory_space<vmem>>, vector<16x2048xbf16>
    %4 = arith.extf %3 : vector<16x2048xbf16> to vector<16x2048xf32>
    %c0_3 = arith.constant 0 : index
    %c0_4 = arith.constant 0 : index
    %5 = vector.load %arg3[%c0_3, %c0_4] : memref<1x8192xf32, #tpu.memory_space<vmem>>, vector<1x2048xf32>
    %6 = vector.broadcast %5 : vector<1x2048xf32> to vector<16x2048xf32>
    %7 = arith.mulf %2, %6 : vector<16x2048xf32>
    %8 = vector.broadcast %5 : vector<1x2048xf32> to vector<16x2048xf32>
    %9 = arith.mulf %4, %8 : vector<16x2048xf32>
    %10 = arith.minimumf %7, %9 : vector<16x2048xf32>
    %11 = arith.mulf %10, %9 : vector<16x2048xf32>
    %cst_5 = arith.constant dense<0.000000e+00> : vector<16xf32>
    %12 = vector.multi_reduction <add>, %11, %cst_5 [1] : vector<16x2048xf32> to vector<16xf32>
    %13 = vector.shape_cast %12 : vector<16xf32> to vector<16x1xf32>
    %14 = arith.mulf %7, %7 : vector<16x2048xf32>
    %cst_6 = arith.constant dense<0.000000e+00> : vector<16xf32>
    %15 = vector.multi_reduction <add>, %14, %cst_6 [1] : vector<16x2048xf32> to vector<16xf32>
    %16 = vector.shape_cast %15 : vector<16xf32> to vector<16x1xf32>
    %17 = arith.mulf %9, %9 : vector<16x2048xf32>
    %cst_7 = arith.constant dense<0.000000e+00> : vector<16xf32>
    %18 = vector.multi_reduction <add>, %17, %cst_7 [1] : vector<16x2048xf32> to vector<16xf32>
    %19 = vector.shape_cast %18 : vector<16xf32> to vector<16x1xf32>
    %20 = arith.mulf %16, %19 : vector<16x1xf32>
    %cst_8 = arith.constant 1.000000e-18 : f32
    %21 = vector.broadcast %cst_8 : f32 to vector<16x1xf32>
    %22 = arith.maximumf %20, %21 : vector<16x1xf32>
    %23 = math.rsqrt %22 : vector<16x1xf32>
    %cst_9 = arith.constant 0.000000e+00 : f32
    %24 = vector.broadcast %cst_9 : f32 to vector<16x1xf32>
    %25 = arith.cmpf ogt, %20, %24 : vector<16x1xf32>
    %26 = arith.mulf %13, %23 : vector<16x1xf32>
    %cst_10 = arith.constant 0.000000e+00 : f32
    %27 = vector.broadcast %cst_10 : f32 to vector<16x1xf32>
    %28 = arith.select %25, %26, %27 : vector<16x1xi1>, vector<16x1xf32>
    %29 = arith.addf %0, %28 : vector<16x1xf32>
    %c0_11 = arith.constant 0 : index
    %c2048 = arith.constant 2048 : index
    %30 = vector.load %arg1[%c0_11, %c2048] : memref<16x8192xbf16, #tpu.memory_space<vmem>>, vector<16x2048xbf16>
    %31 = arith.extf %30 : vector<16x2048xbf16> to vector<16x2048xf32>
    %c0_12 = arith.constant 0 : index
    %c2048_13 = arith.constant 2048 : index
    %32 = vector.load %arg2[%c0_12, %c2048_13] : memref<16x8192xbf16, #tpu.memory_space<vmem>>, vector<16x2048xbf16>
    %33 = arith.extf %32 : vector<16x2048xbf16> to vector<16x2048xf32>
    %c0_14 = arith.constant 0 : index
    %c2048_15 = arith.constant 2048 : index
    %34 = vector.load %arg3[%c0_14, %c2048_15] : memref<1x8192xf32, #tpu.memory_space<vmem>>, vector<1x2048xf32>
    %35 = vector.broadcast %34 : vector<1x2048xf32> to vector<16x2048xf32>
    %36 = arith.mulf %31, %35 : vector<16x2048xf32>
    %37 = vector.broadcast %34 : vector<1x2048xf32> to vector<16x2048xf32>
    %38 = arith.mulf %33, %37 : vector<16x2048xf32>
    %39 = arith.minimumf %36, %38 : vector<16x2048xf32>
    %40 = arith.mulf %39, %38 : vector<16x2048xf32>
    %cst_16 = arith.constant dense<0.000000e+00> : vector<16xf32>
    %41 = vector.multi_reduction <add>, %40, %cst_16 [1] : vector<16x2048xf32> to vector<16xf32>
    %42 = vector.shape_cast %41 : vector<16xf32> to vector<16x1xf32>
    %43 = arith.mulf %36, %36 : vector<16x2048xf32>
    %cst_17 = arith.constant dense<0.000000e+00> : vector<16xf32>
    %44 = vector.multi_reduction <add>, %43, %cst_17 [1] : vector<16x2048xf32> to vector<16xf32>
    %45 = vector.shape_cast %44 : vector<16xf32> to vector<16x1xf32>
    %46 = arith.mulf %38, %38 : vector<16x2048xf32>
    %cst_18 = arith.constant dense<0.000000e+00> : vector<16xf32>
    %47 = vector.multi_reduction <add>, %46, %cst_18 [1] : vector<16x2048xf32> to vector<16xf32>
    %48 = vector.shape_cast %47 : vector<16xf32> to vector<16x1xf32>
    %49 = arith.mulf %45, %48 : vector<16x1xf32>
    %cst_19 = arith.constant 1.000000e-18 : f32
    %50 = vector.broadcast %cst_19 : f32 to vector<16x1xf32>
    %51 = arith.maximumf %49, %50 : vector<16x1xf32>
    %52 = math.rsqrt %51 : vector<16x1xf32>
    %cst_20 = arith.constant 0.000000e+00 : f32
    %53 = vector.broadcast %cst_20 : f32 to vector<16x1xf32>
    %54 = arith.cmpf ogt, %49, %53 : vector<16x1xf32>
    %55 = arith.mulf %42, %52 : vector<16x1xf32>
    %cst_21 = arith.constant 0.000000e+00 : f32
    %56 = vector.broadcast %cst_21 : f32 to vector<16x1xf32>
    %57 = arith.select %54, %55, %56 : vector<16x1xi1>, vector<16x1xf32>
    %58 = arith.addf %29, %57 : vector<16x1xf32>
    %cst_22 = arith.constant dense<0.000000e+00> : vector<16xf32>
    %59 = vector.multi_reduction <add>, %31, %cst_22 [1] : vector<16x2048xf32> to vector<16xf32>
    %60 = vector.shape_cast %59 : vector<16xf32> to vector<16x1xf32>
    %cst_23 = arith.constant dense<0.000000e+00> : vector<16xf32>
    %61 = vector.multi_reduction <add>, %33, %cst_23 [1] : vector<16x2048xf32> to vector<16xf32>
    %62 = vector.shape_cast %61 : vector<16xf32> to vector<16x1xf32>
    %c0_24 = arith.constant 0 : index
    %c4096 = arith.constant 4096 : index
    %63 = vector.load %arg1[%c0_24, %c4096] : memref<16x8192xbf16, #tpu.memory_space<vmem>>, vector<16x2048xbf16>
    %64 = arith.extf %63 : vector<16x2048xbf16> to vector<16x2048xf32>
    %c0_25 = arith.constant 0 : index
    %c4096_26 = arith.constant 4096 : index
    %65 = vector.load %arg2[%c0_25, %c4096_26] : memref<16x8192xbf16, #tpu.memory_space<vmem>>, vector<16x2048xbf16>
    %66 = arith.extf %65 : vector<16x2048xbf16> to vector<16x2048xf32>
    %c0_27 = arith.constant 0 : index
    %c4096_28 = arith.constant 4096 : index
    %67 = vector.load %arg3[%c0_27, %c4096_28] : memref<1x8192xf32, #tpu.memory_space<vmem>>, vector<1x2048xf32>
    %68 = vector.broadcast %67 : vector<1x2048xf32> to vector<16x2048xf32>
    %69 = arith.mulf %64, %68 : vector<16x2048xf32>
    %70 = vector.broadcast %67 : vector<1x2048xf32> to vector<16x2048xf32>
    %71 = arith.mulf %66, %70 : vector<16x2048xf32>
    %72 = arith.minimumf %69, %71 : vector<16x2048xf32>
    %73 = arith.mulf %72, %71 : vector<16x2048xf32>
    %cst_29 = arith.constant dense<0.000000e+00> : vector<16xf32>
    %74 = vector.multi_reduction <add>, %73, %cst_29 [1] : vector<16x2048xf32> to vector<16xf32>
    %75 = vector.shape_cast %74 : vector<16xf32> to vector<16x1xf32>
    %76 = arith.mulf %69, %69 : vector<16x2048xf32>
    %cst_30 = arith.constant dense<0.000000e+00> : vector<16xf32>
    %77 = vector.multi_reduction <add>, %76, %cst_30 [1] : vector<16x2048xf32> to vector<16xf32>
    %78 = vector.shape_cast %77 : vector<16xf32> to vector<16x1xf32>
    %79 = arith.mulf %71, %71 : vector<16x2048xf32>
    %cst_31 = arith.constant dense<0.000000e+00> : vector<16xf32>
    %80 = vector.multi_reduction <add>, %79, %cst_31 [1] : vector<16x2048xf32> to vector<16xf32>
    %81 = vector.shape_cast %80 : vector<16xf32> to vector<16x1xf32>
    %82 = arith.mulf %78, %81 : vector<16x1xf32>
    %cst_32 = arith.constant 1.000000e-18 : f32
    %83 = vector.broadcast %cst_32 : f32 to vector<16x1xf32>
    %84 = arith.maximumf %82, %83 : vector<16x1xf32>
    %85 = math.rsqrt %84 : vector<16x1xf32>
    %cst_33 = arith.constant 0.000000e+00 : f32
    %86 = vector.broadcast %cst_33 : f32 to vector<16x1xf32>
    %87 = arith.cmpf ogt, %82, %86 : vector<16x1xf32>
    %88 = arith.mulf %75, %85 : vector<16x1xf32>
    %cst_34 = arith.constant 0.000000e+00 : f32
    %89 = vector.broadcast %cst_34 : f32 to vector<16x1xf32>
    %90 = arith.select %87, %88, %89 : vector<16x1xi1>, vector<16x1xf32>
    %91 = arith.addf %58, %90 : vector<16x1xf32>
    %c0_35 = arith.constant 0 : index
    %c6144 = arith.constant 6144 : index
    %92 = vector.load %arg1[%c0_35, %c6144] : memref<16x8192xbf16, #tpu.memory_space<vmem>>, vector<16x2048xbf16>
    %93 = arith.extf %92 : vector<16x2048xbf16> to vector<16x2048xf32>
    %c0_36 = arith.constant 0 : index
    %c6144_37 = arith.constant 6144 : index
    %94 = vector.load %arg2[%c0_36, %c6144_37] : memref<16x8192xbf16, #tpu.memory_space<vmem>>, vector<16x2048xbf16>
    %95 = arith.extf %94 : vector<16x2048xbf16> to vector<16x2048xf32>
    %c0_38 = arith.constant 0 : index
    %c6144_39 = arith.constant 6144 : index
    %96 = vector.load %arg3[%c0_38, %c6144_39] : memref<1x8192xf32, #tpu.memory_space<vmem>>, vector<1x2048xf32>
    %97 = vector.broadcast %96 : vector<1x2048xf32> to vector<16x2048xf32>
    %98 = arith.mulf %93, %97 : vector<16x2048xf32>
    %99 = vector.broadcast %96 : vector<1x2048xf32> to vector<16x2048xf32>
    %100 = arith.mulf %95, %99 : vector<16x2048xf32>
    %101 = arith.minimumf %98, %100 : vector<16x2048xf32>
    %102 = arith.mulf %101, %100 : vector<16x2048xf32>
    %cst_40 = arith.constant dense<0.000000e+00> : vector<16xf32>
    %103 = vector.multi_reduction <add>, %102, %cst_40 [1] : vector<16x2048xf32> to vector<16xf32>
    %104 = vector.shape_cast %103 : vector<16xf32> to vector<16x1xf32>
    %105 = arith.mulf %98, %98 : vector<16x2048xf32>
    %cst_41 = arith.constant dense<0.000000e+00> : vector<16xf32>
    %106 = vector.multi_reduction <add>, %105, %cst_41 [1] : vector<16x2048xf32> to vector<16xf32>
    %107 = vector.shape_cast %106 : vector<16xf32> to vector<16x1xf32>
    %108 = arith.mulf %100, %100 : vector<16x2048xf32>
    %cst_42 = arith.constant dense<0.000000e+00> : vector<16xf32>
    %109 = vector.multi_reduction <add>, %108, %cst_42 [1] : vector<16x2048xf32> to vector<16xf32>
    %110 = vector.shape_cast %109 : vector<16xf32> to vector<16x1xf32>
    %111 = arith.mulf %107, %110 : vector<16x1xf32>
    %cst_43 = arith.constant 1.000000e-18 : f32
    %112 = vector.broadcast %cst_43 : f32 to vector<16x1xf32>
    %113 = arith.maximumf %111, %112 : vector<16x1xf32>
    %114 = math.rsqrt %113 : vector<16x1xf32>
    %cst_44 = arith.constant 0.000000e+00 : f32
    %115 = vector.broadcast %cst_44 : f32 to vector<16x1xf32>
    %116 = arith.cmpf ogt, %111, %115 : vector<16x1xf32>
    %117 = arith.mulf %104, %114 : vector<16x1xf32>
    %cst_45 = arith.constant 0.000000e+00 : f32
    %118 = vector.broadcast %cst_45 : f32 to vector<16x1xf32>
    %119 = arith.select %116, %117, %118 : vector<16x1xi1>, vector<16x1xf32>
    %120 = arith.addf %91, %119 : vector<16x1xf32>
    %121 = arith.subf %60, %62 : vector<16x1xf32>
    %122 = arith.mulf %121, %121 : vector<16x1xf32>
    %cst_46 = arith.constant 0.000000e+00 : f32
    %123 = vector.broadcast %cst_46 : f32 to vector<16x1xf32>
    %124 = arith.subf %123, %122 : vector<16x1xf32>
    %cst_47 = arith.constant 7.200000e+01 : f32
    %125 = vector.broadcast %cst_47 : f32 to vector<16x1xf32>
    %126 = arith.divf %124, %125 : vector<16x1xf32>
    %127 = math.exp %126 : vector<16x1xf32>
    %cst_48 = arith.constant 2.500000e+00 : f32
    %128 = vector.broadcast %cst_48 : f32 to vector<16x1xf32>
    %129 = arith.mulf %128, %120 : vector<16x1xf32>
    %130 = arith.mulf %129, %127 : vector<16x1xf32>
    %131 = vector.shape_cast %130 : vector<16x1xf32> to vector<16x1xf32>
    %132 = vector.broadcast %131 : vector<16x1xf32> to vector<16x128xf32>
    %c0_49 = arith.constant 0 : index
    %c0_50 = arith.constant 0 : index
    %133 = vector.load %arg4[%c0_49, %c0_50] : memref<16x128xf32, #tpu.memory_space<vmem>>, vector<16x128xf32>
    tpu.vector_store %arg4[%c0_49, %c0_50], %132 {strides = array<i32>} : memref<16x128xf32, #tpu.memory_space<vmem>>, vector<16x128xf32>,
    return
  }
  func.func @transform_0(%arg0: i32) -> (i32, i32) {
    %c0_i32 = arith.constant 0 : i32
    %c0_i32_0 = arith.constant 0 : i32
    return %arg0, %c0_i32 : i32, i32
  }
  func.func @transform_1(%arg0: i32) -> (i32, i32) {
    %c0_i32 = arith.constant 0 : i32
    %c0_i32_0 = arith.constant 0 : i32
    return %arg0, %c0_i32 : i32, i32
  }
  func.func @transform_2(%arg0: i32) -> (i32, i32) {
    %c0_i32 = arith.constant 0 : i32
    %c0_i32_0 = arith.constant 0 : i32
    %c0_i32_1 = arith.constant 0 : i32
    return %c0_i32, %c0_i32_0 : i32, i32
  }
  func.func @transform_3(%arg0: i32) -> (i32, i32) {
    %c0_i32 = arith.constant 0 : i32
    %c0_i32_0 = arith.constant 0 : i32
    return %arg0, %c0_i32 : i32, i32
  }
}

</mosaic_0001>

<llo_original>
// kernel: cider_d_forward.1
$region0: #{cider_d_forward.1}
  #allocation0 [shape = 'u32[]', space=smem, size = 0x4, offset = 0x4, fixed_abs, tag = 'smem constant byte address 0x4 - core index']
  #allocation1 [shape = 'u32[144,128]{1,0:T(1,128)}', space=vmem, size = 0x12000, scoped, tag = 'internal scratch']
  %s0 = inlined_call_operand.vmem [shape: bf16[16,8192], index: 0, kind: input, shape index: {}]
  %s1 = inlined_call_operand.vmem [shape: bf16[16,8192], index: 1, kind: input, shape index: {}]
  %s2 = inlined_call_operand.vmem [shape: f32[1,8192], index: 2, kind: input, shape index: {}]
  %s3 = inlined_call_operand.vmem [shape: f32[16,128], index: 3, kind: output, shape index: {}]
  %s4 = sld [smem:[#allocation0]]
  $region22: #{cider_d_forward.1} parent=0
    _
  %s6 = ssub.s32 1, %s4
  %s7 = scalar_select 0, %s6, %s4
  // Predicated region
  $region2: #{cider_d_forward.1} parent=0 // pred_check
    _
  $region3: #{cider_d_forward.1} parent=0 // pred_check_branch
    %9 = sbr.rel (0) target = $region5
  $region4: #{cider_d_forward.1} parent=0 // pred_region
    _
  $region5: #{cider_d_forward.1} parent=0 // pred_fallthru
    _
  // Predicated region
  $region6: #{cider_d_forward.1} parent=0 // pred_check
    _
  $region7: #{cider_d_forward.1} parent=0 // pred_check_branch
    %11 = sbr.rel (0) target = $region9
  $region8: #{cider_d_forward.1} parent=0 // pred_region
    _
  $region9: #{cider_d_forward.1} parent=0 // pred_fallthru
    _
  // Predicated region
  $region10: #{cider_d_forward.1} parent=0 // pred_check
    _
  $region11: #{cider_d_forward.1} parent=0 // pred_check_branch
    %13 = sbr.rel (0) target = $region13
  $region12: #{cider_d_forward.1} parent=0 // pred_region
    _
  $region13: #{cider_d_forward.1} parent=0 // pred_fallthru
    _
  %v14 = vld [vmem:[%s0] sm:$0xff]
  %v15 = vld [vmem:[%s0 + $0x8] sm:$0xff]
  %v16 = vld [vmem:[%s0 + $0x10] sm:$0xff]
  %v17 = vld [vmem:[%s0 + $0x18] sm:$0xff]
  %v18 = vld [vmem:[%s0 + $0x20] sm:$0xff]
  %v19 = vld [vmem:[%s0 + $0x28] sm:$0xff]
  %v20 = vld [vmem:[%s0 + $0x30] sm:$0xff]
  %v21 = vld [vmem:[%s0 + $0x38] sm:$0xff]
  %v22 = vld [vmem:[%s0 + $0x100] sm:$0xff]
  %v23 = vld [vmem:[%s0 + $0x108] sm:$0xff]
  %v24 = vld [vmem:[%s0 + $0x110] sm:$0xff]
  %v25 = vld [vmem:[%s0 + $0x118] sm:$0xff]
  %v26 = vld [vmem:[%s0 + $0x120] sm:$0xff]
  %v27 = vld [vmem:[%s0 + $0x128] sm:$0xff]
  %v28 = vld [vmem:[%s0 + $0x130] sm:$0xff]
  %v29 = vld [vmem:[%s0 + $0x138] sm:$0xff]
  %v30 = vunpack.c.l.bf16 %v14
  %v31 = vunpack.c.h.bf16 %v14
  %v32 = vunpack.c.l.bf16 %v15
  %v33 = vunpack.c.h.bf16 %v15
  %v34 = vunpack.c.l.bf16 %v16
  %v35 = vunpack.c.h.bf16 %v16
  %v36 = vunpack.c.l.bf16 %v17
  %v37 = vunpack.c.h.bf16 %v17
  %v38 = vunpack.c.l.bf16 %v18
  %v39 = vunpack.c.h.bf16 %v18
  %v40 = vunpack.c.l.bf16 %v19
  %v41 = vunpack.c.h.bf16 %v19
  %v42 = vunpack.c.l.bf16 %v20
  %v43 = vunpack.c.h.bf16 %v20
  %v44 = vunpack.c.l.bf16 %v21
  %v45 = vunpack.c.h.bf16 %v21
  %v46 = vunpack.c.l.bf16 %v22
  %v47 = vunpack.c.h.bf16 %v22
  %v48 = vunpack.c.l.bf16 %v23
  %v49 = vunpack.c.h.bf16 %v23
  %v50 = vunpack.c.l.bf16 %v24
  %v51 = vunpack.c.h.bf16 %v24
  %v52 = vunpack.c.l.bf16 %v25
  %v53 = vunpack.c.h.bf16 %v25
  %v54 = vunpack.c.l.bf16 %v26
  %v55 = vunpack.c.h.bf16 %v26
  %v56 = vunpack.c.l.bf16 %v27
  %v57 = vunpack.c.h.bf16 %v27
  %v58 = vunpack.c.l.bf16 %v28
  %v59 = vunpack.c.h.bf16 %v28
  %v60 = vunpack.c.l.bf16 %v29
  %v61 = vunpack.c.h.bf16 %v29
  %v62 = vld [vmem:[%s1] sm:$0xff]
  %v63 = vld [vmem:[%s1 + $0x8] sm:$0xff]
  %v64 = vld [vmem:[%s1 + $0x10] sm:$0xff]
  %v65 = vld [vmem:[%s1 + $0x18] sm:$0xff]
  %v66 = vld [vmem:[%s1 + $0x20] sm:$0xff]
  %v67 = vld [vmem:[%s1 + $0x28] sm:$0xff]
  %v68 = vld [vmem:[%s1 + $0x30] sm:$0xff]
  %v69 = vld [vmem:[%s1 + $0x38] sm:$0xff]
  %v70 = vld [vmem:[%s1 + $0x100] sm:$0xff]
  %v71 = vld [vmem:[%s1 + $0x108] sm:$0xff]
  %v72 = vld [vmem:[%s1 + $0x110] sm:$0xff]
  %v73 = vld [vmem:[%s1 + $0x118] sm:$0xff]
  %v74 = vld [vmem:[%s1 + $0x120] sm:$0xff]
  %v75 = vld [vmem:[%s1 + $0x128] sm:$0xff]
  %v76 = vld [vmem:[%s1 + $0x130] sm:$0xff]
  %v77 = vld [vmem:[%s1 + $0x138] sm:$0xff]
  %v78 = vunpack.c.l.bf16 %v62
  %v79 = vunpack.c.h.bf16 %v62
  %v80 = vunpack.c.l.bf16 %v63
  %v81 = vunpack.c.h.bf16 %v63
  %v82 = vunpack.c.l.bf16 %v64
  %v83 = vunpack.c.h.bf16 %v64
  %v84 = vunpack.c.l.bf16 %v65
  %v85 = vunpack.c.h.bf16 %v65
  %v86 = vunpack.c.l.bf16 %v66
  %v87 = vunpack.c.h.bf16 %v66
  %v88 = vunpack.c.l.bf16 %v67
  %v89 = vunpack.c.h.bf16 %v67
  %v90 = vunpack.c.l.bf16 %v68
  %v91 = vunpack.c.h.bf16 %v68
  %v92 = vunpack.c.l.bf16 %v69
  %v93 = vunpack.c.h.bf16 %v69
  %v94 = vunpack.c.l.bf16 %v70
  %v95 = vunpack.c.h.bf16 %v70
  %v96 = vunpack.c.l.bf16 %v71
  %v97 = vunpack.c.h.bf16 %v71
  %v98 = vunpack.c.l.bf16 %v72
  %v99 = vunpack.c.h.bf16 %v72
  %v100 = vunpack.c.l.bf16 %v73
  %v101 = vunpack.c.h.bf16 %v73
  %v102 = vunpack.c.l.bf16 %v74
  %v103 = vunpack.c.h.bf16 %v74
  %v104 = vunpack.c.l.bf16 %v75
  %v105 = vunpack.c.h.bf16 %v75
  %v106 = vunpack.c.l.bf16 %v76
  %v107 = vunpack.c.h.bf16 %v76
  %v108 = vunpack.c.l.bf16 %v77
  %v109 = vunpack.c.h.bf16 %v77
  %v110 = vld [vmem:[%s2] sm:$0xff]
  %v111 = vld [vmem:[%s2 + $0x8] sm:$0xff]
  %v114 = vlaneseq
  %v115 = vshrl.u32 %v114, 7
  %v116 = vsub.s32 0, %v115
  %v117 = vrot.slane %v110, %v116
  %v118 = vlaneseq
  %v119 = vshrl.u32 %v118, 7
  %v120 = vsub.s32 1, %v119
  %v121 = vrot.slane %v110, %v120
  %v122 = vlaneseq
  %v123 = vshrl.u32 %v122, 7
  %v124 = vsub.s32 2, %v123
  %v125 = vrot.slane %v110, %v124
  %v126 = vlaneseq
  %v127 = vshrl.u32 %v126, 7
  %v128 = vsub.s32 3, %v127
  %v129 = vrot.slane %v110, %v128
  %v130 = vlaneseq
  %v131 = vshrl.u32 %v130, 7
  %v132 = vsub.s32 4, %v131
  %v133 = vrot.slane %v110, %v132
  %v134 = vlaneseq
  %v135 = vshrl.u32 %v134, 7
  %v136 = vsub.s32 5, %v135
  %v137 = vrot.slane %v110, %v136
  %v138 = vlaneseq
  %v139 = vshrl.u32 %v138, 7
  %v140 = vsub.s32 6, %v139
  %v141 = vrot.slane %v110, %v140
  %v142 = vlaneseq
  %v143 = vshrl.u32 %v142, 7
  %v144 = vsub.s32 7, %v143
  %v145 = vrot.slane %v110, %v144
  %v146 = vlaneseq
  %v147 = vshrl.u32 %v146, 7
  %v148 = vsub.s32 0, %v147
  %v149 = vrot.slane %v111, %v148
  %v150 = vlaneseq
  %v151 = vshrl.u32 %v150, 7
  %v152 = vsub.s32 1, %v151
  %v153 = vrot.slane %v111, %v152
  %v154 = vlaneseq
  %v155 = vshrl.u32 %v154, 7
  %v156 = vsub.s32 2, %v155
  %v157 = vrot.slane %v111, %v156
  %v158 = vlaneseq
  %v159 = vshrl.u32 %v158, 7
  %v160 = vsub.s32 3, %v159
  %v161 = vrot.slane %v111, %v160
  %v162 = vlaneseq
  %v163 = vshrl.u32 %v162, 7
  %v164 = vsub.s32 4, %v163
  %v165 = vrot.slane %v111, %v164
  %v166 = vlaneseq
  %v167 = vshrl.u32 %v166, 7
  %v168 = vsub.s32 5, %v167
  %v169 = vrot.slane %v111, %v168
  %v170 = vlaneseq
  %v171 = vshrl.u32 %v170, 7
  %v172 = vsub.s32 6, %v171
  %v173 = vrot.slane %v111, %v172
  %v174 = vlaneseq
  %v175 = vshrl.u32 %v174, 7
  %v176 = vsub.s32 7, %v175
  %v177 = vrot.slane %v111, %v176
  %v194 = vmul.f32 %v30, %v117
  %v195 = vmul.f32 %v31, %v121
  %v196 = vmul.f32 %v32, %v125
  %v197 = vmul.f32 %v33, %v129
  %v198 = vmul.f32 %v34, %v133
  %v199 = vmul.f32 %v35, %v137
  %v200 = vmul.f32 %v36, %v141
  %v201 = vmul.f32 %v37, %v145
  %v202 = vmul.f32 %v38, %v149
  %v203 = vmul.f32 %v39, %v153
  %v204 = vmul.f32 %v40, %v157
  %v205 = vmul.f32 %v41, %v161
  %v206 = vmul.f32 %v42, %v165
  %v207 = vmul.f32 %v43, %v169
  %v208 = vmul.f32 %v44, %v173
  %v209 = vmul.f32 %v45, %v177
  %v210 = vmul.f32 %v46, %v117
  %v211 = vmul.f32 %v47, %v121
  %v212 = vmul.f32 %v48, %v125
  %v213 = vmul.f32 %v49, %v129
  %v214 = vmul.f32 %v50, %v133
  %v215 = vmul.f32 %v51, %v137
  %v216 = vmul.f32 %v52, %v141
  %v217 = vmul.f32 %v53, %v145
  %v218 = vmul.f32 %v54, %v149
  %v219 = vmul.f32 %v55, %v153
  %v220 = vmul.f32 %v56, %v157
  %v221 = vmul.f32 %v57, %v161
  %v222 = vmul.f32 %v58, %v165
  %v223 = vmul.f32 %v59, %v169
  %v224 = vmul.f32 %v60, %v173
  %v225 = vmul.f32 %v61, %v177
  %v226 = vmul.f32 %v78, %v117
  %v227 = vmul.f32 %v79, %v121
  %v228 = vmul.f32 %v80, %v125
  %v229 = vmul.f32 %v81, %v129
  %v230 = vmul.f32 %v82, %v133
  %v231 = vmul.f32 %v83, %v137
  %v232 = vmul.f32 %v84, %v141
  %v233 = vmul.f32 %v85, %v145
  %v234 = vmul.f32 %v86, %v149
  %v235 = vmul.f32 %v87, %v153
  %v236 = vmul.f32 %v88, %v157
  %v237 = vmul.f32 %v89, %v161
  %v238 = vmul.f32 %v90, %v165
  %v239 = vmul.f32 %v91, %v169
  %v240 = vmul.f32 %v92, %v173
  %v241 = vmul.f32 %v93, %v177
  %v242 = vmul.f32 %v94, %v117
  %v243 = vmul.f32 %v95, %v121
  %v244 = vmul.f32 %v96, %v125
  %v245 = vmul.f32 %v97, %v129
  %v246 = vmul.f32 %v98, %v133
  %v247 = vmul.f32 %v99, %v137
  %v248 = vmul.f32 %v100, %v141
  %v249 = vmul.f32 %v101, %v145
  %v250 = vmul.f32 %v102, %v149
  %v251 = vmul.f32 %v103, %v153
  %v252 = vmul.f32 %v104, %v157
  %v253 = vmul.f32 %v105, %v161
  %v254 = vmul.f32 %v106, %v165
  %v255 = vmul.f32 %v107, %v169
  %v256 = vmul.f32 %v108, %v173
  %v257 = vmul.f32 %v109, %v177
  %v258 = vmin.f32 %v194, %v226
  %v259 = vmin.f32 %v195, %v227
  %v260 = vmin.f32 %v196, %v228
  %v261 = vmin.f32 %v197, %v229
  %v262 = vmin.f32 %v198, %v230
  %v263 = vmin.f32 %v199, %v231
  %v264 = vmin.f32 %v200, %v232
  %v265 = vmin.f32 %v201, %v233
  %v266 = vmin.f32 %v202, %v234
  %v267 = vmin.f32 %v203, %v235
  %v268 = vmin.f32 %v204, %v236
  %v269 = vmin.f32 %v205, %v237
  %v270 = vmin.f32 %v206, %v238
  %v271 = vmin.f32 %v207, %v239
  %v272 = vmin.f32 %v208, %v240
  %v273 = vmin.f32 %v209, %v241
  %v274 = vmin.f32 %v210, %v242
  %v275 = vmin.f32 %v211, %v243
  %v276 = vmin.f32 %v212, %v244
  %v277 = vmin.f32 %v213, %v245
  %v278 = vmin.f32 %v214, %v246
  %v279 = vmin.f32 %v215, %v247
  %v280 = vmin.f32 %v216, %v248
  %v281 = vmin.f32 %v217, %v249
  %v282 = vmin.f32 %v218, %v250
  %v283 = vmin.f32 %v219, %v251
  %v284 = vmin.f32 %v220, %v252
  %v285 = vmin.f32 %v221, %v253
  %v286 = vmin.f32 %v222, %v254
  %v287 = vmin.f32 %v223, %v255
  %v288 = vmin.f32 %v224, %v256
  %v289 = vmin.f32 %v225, %v257
  %v290 = vmul.f32 %v258, %v226
  %v291 = vmul.f32 %v259, %v227
  %v292 = vmul.f32 %v260, %v228
  %v293 = vmul.f32 %v261, %v229
  %v294 = vmul.f32 %v262, %v230
  %v295 = vmul.f32 %v263, %v231
  %v296 = vmul.f32 %v264, %v232
  %v297 = vmul.f32 %v265, %v233
  %v298 = vmul.f32 %v266, %v234
  %v299 = vmul.f32 %v267, %v235
  %v300 = vmul.f32 %v268, %v236
  %v301 = vmul.f32 %v269, %v237
  %v302 = vmul.f32 %v270, %v238
  %v303 = vmul.f32 %v271, %v239
  %v304 = vmul.f32 %v272, %v240
  %v305 = vmul.f32 %v273, %v241
  %v306 = vmul.f32 %v274, %v242
  %v307 = vmul.f32 %v275, %v243
  %v308 = vmul.f32 %v276, %v244
  %v309 = vmul.f32 %v277, %v245
  %v310 = vmul.f32 %v278, %v246
  %v311 = vmul.f32 %v279, %v247
  %v312 = vmul.f32 %v280, %v248
  %v313 = vmul.f32 %v281, %v249
  %v314 = vmul.f32 %v282, %v250
  %v315 = vmul.f32 %v283, %v251
  %v316 = vmul.f32 %v284, %v252
  %v317 = vmul.f32 %v285, %v253
  %v318 = vmul.f32 %v286, %v254
  %v319 = vmul.f32 %v287, %v255
  %v320 = vmul.f32 %v288, %v256
  %v321 = vmul.f32 %v289, %v257
  %v322 = vadd.f32 %v290, %v291
  %v323 = vadd.f32 %v322, %v292
  %v324 = vadd.f32 %v323, %v293
  %v325 = vadd.f32 %v324, %v294
  %v326 = vadd.f32 %v325, %v295
  %v327 = vadd.f32 %v326, %v296
  %v328 = vadd.f32 %v327, %v297
  %v329 = vadd.f32 %v328, %v298
  %v330 = vadd.f32 %v329, %v299
  %v331 = vadd.f32 %v330, %v300
  %v332 = vadd.f32 %v331, %v301
  %v333 = vadd.f32 %v332, %v302
  %v334 = vadd.f32 %v333, %v303
  %v335 = vadd.f32 %v334, %v304
  %v336 = vadd.f32 %v335, %v305
  %337 = vadd.xlane.f32.xlu0 %v336
  %v338 = vpop.xlane.xlu0 %337
  %v339 = vadd.f32 %v306, %v307
  %v340 = vadd.f32 %v339, %v308
  %v341 = vadd.f32 %v340, %v309
  %v342 = vadd.f32 %v341, %v310
  %v343 = vadd.f32 %v342, %v311
  %v344 = vadd.f32 %v343, %v312
  %v345 = vadd.f32 %v344, %v313
  %v346 = vadd.f32 %v345, %v314
  %v347 = vadd.f32 %v346, %v315
  %v348 = vadd.f32 %v347, %v316
  %v349 = vadd.f32 %v348, %v317
  %v350 = vadd.f32 %v349, %v318
  %v351 = vadd.f32 %v350, %v319
  %v352 = vadd.f32 %v351, %v320
  %v353 = vadd.f32 %v352, %v321
  %354 = vadd.xlane.f32.xlu0 %v353
  %v355 = vpop.xlane.xlu0 %354
  %v356 = vmul.f32 %v194, %v194
  %v357 = vmul.f32 %v195, %v195
  %v358 = vmul.f32 %v196, %v196
  %v359 = vmul.f32 %v197, %v197
  %v360 = vmul.f32 %v198, %v198
  %v361 = vmul.f32 %v199, %v199
  %v362 = vmul.f32 %v200, %v200
  %v363 = vmul.f32 %v201, %v201
  %v364 = vmul.f32 %v202, %v202
  %v365 = vmul.f32 %v203, %v203
  %v366 = vmul.f32 %v204, %v204
  %v367 = vmul.f32 %v205, %v205
  %v368 = vmul.f32 %v206, %v206
  %v369 = vmul.f32 %v207, %v207
  %v370 = vmul.f32 %v208, %v208
  %v371 = vmul.f32 %v209, %v209
  %v372 = vmul.f32 %v210, %v210
  %v373 = vmul.f32 %v211, %v211
  %v374 = vmul.f32 %v212, %v212
  %v375 = vmul.f32 %v213, %v213
  %v376 = vmul.f32 %v214, %v214
  %v377 = vmul.f32 %v215, %v215
  %v378 = vmul.f32 %v216, %v216
  %v379 = vmul.f32 %v217, %v217
  %v380 = vmul.f32 %v218, %v218
  %v381 = vmul.f32 %v219, %v219
  %v382 = vmul.f32 %v220, %v220
  %v383 = vmul.f32 %v221, %v221
  %v384 = vmul.f32 %v222, %v222
  %v385 = vmul.f32 %v223, %v223
  %v386 = vmul.f32 %v224, %v224
  %v387 = vmul.f32 %v225, %v225
  %v388 = vadd.f32 %v356, %v357
  %v389 = vadd.f32 %v388, %v358
  %v390 = vadd.f32 %v389, %v359
  %v391 = vadd.f32 %v390, %v360
  %v392 = vadd.f32 %v391, %v361
  %v393 = vadd.f32 %v392, %v362
  %v394 = vadd.f32 %v393, %v363
  %v395 = vadd.f32 %v394, %v364
  %v396 = vadd.f32 %v395, %v365
  %v397 = vadd.f32 %v396, %v366
  %v398 = vadd.f32 %v397, %v367
  %v399 = vadd.f32 %v398, %v368
  %v400 = vadd.f32 %v399, %v369
  %v401 = vadd.f32 %v400, %v370
  %v402 = vadd.f32 %v401, %v371
  %403 = vadd.xlane.f32.xlu0 %v402
  %v404 = vpop.xlane.xlu0 %403
  %v405 = vadd.f32 %v372, %v373
  %v406 = vadd.f32 %v405, %v374
  %v407 = vadd.f32 %v406, %v375
  %v408 = vadd.f32 %v407, %v376
  %v409 = vadd.f32 %v408, %v377
  %v410 = vadd.f32 %v409, %v378
  %v411 = vadd.f32 %v410, %v379
  %v412 = vadd.f32 %v411, %v380
  %v413 = vadd.f32 %v412, %v381
  %v414 = vadd.f32 %v413, %v382
  %v415 = vadd.f32 %v414, %v383
  %v416 = vadd.f32 %v415, %v384
  %v417 = vadd.f32 %v416, %v385
  %v418 = vadd.f32 %v417, %v386
  %v419 = vadd.f32 %v418, %v387
  %420 = vadd.xlane.f32.xlu0 %v419
  %v421 = vpop.xlane.xlu0 %420
  %v422 = vmul.f32 %v226, %v226
  %v423 = vmul.f32 %v227, %v227
  %v424 = vmul.f32 %v228, %v228
  %v425 = vmul.f32 %v229, %v229
  %v426 = vmul.f32 %v230, %v230
  %v427 = vmul.f32 %v231, %v231
  %v428 = vmul.f32 %v232, %v232
  %v429 = vmul.f32 %v233, %v233
  %v430 = vmul.f32 %v234, %v234
  %v431 = vmul.f32 %v235, %v235
  %v432 = vmul.f32 %v236, %v236
  %v433 = vmul.f32 %v237, %v237
  %v434 = vmul.f32 %v238, %v238
  %v435 = vmul.f32 %v239, %v239
  %v436 = vmul.f32 %v240, %v240
  %v437 = vmul.f32 %v241, %v241
  %v438 = vmul.f32 %v242, %v242
  %v439 = vmul.f32 %v243, %v243
  %v440 = vmul.f32 %v244, %v244
  %v441 = vmul.f32 %v245, %v245
  %v442 = vmul.f32 %v246, %v246
  %v443 = vmul.f32 %v247, %v247
  %v444 = vmul.f32 %v248, %v248
  %v445 = vmul.f32 %v249, %v249
  %v446 = vmul.f32 %v250, %v250
  %v447 = vmul.f32 %v251, %v251
  %v448 = vmul.f32 %v252, %v252
  %v449 = vmul.f32 %v253, %v253
  %v450 = vmul.f32 %v254, %v254
  %v451 = vmul.f32 %v255, %v255
  %v452 = vmul.f32 %v256, %v256
  %v453 = vmul.f32 %v257, %v257
  %v454 = vadd.f32 %v422, %v423
  %v455 = vadd.f32 %v454, %v424
  %v456 = vadd.f32 %v455, %v425
  %v457 = vadd.f32 %v456, %v426
  %v458 = vadd.f32 %v457, %v427
  %v459 = vadd.f32 %v458, %v428
  %v460 = vadd.f32 %v459, %v429
  %v461 = vadd.f32 %v460, %v430
  %v462 = vadd.f32 %v461, %v431
  %v463 = vadd.f32 %v462, %v432
  %v464 = vadd.f32 %v463, %v433
  %v465 = vadd.f32 %v464, %v434
  %v466 = vadd.f32 %v465, %v435
  %v467 = vadd.f32 %v466, %v436
  %v468 = vadd.f32 %v467, %v437
  %469 = vadd.xlane.f32.xlu0 %v468
  %v470 = vpop.xlane.xlu0 %469
  %v471 = vadd.f32 %v438, %v439
  %v472 = vadd.f32 %v471, %v440
  %v473 = vadd.f32 %v472, %v441
  %v474 = vadd.f32 %v473, %v442
  %v475 = vadd.f32 %v474, %v443
  %v476 = vadd.f32 %v475, %v444
  %v477 = vadd.f32 %v476, %v445
  %v478 = vadd.f32 %v477, %v446
  %v479 = vadd.f32 %v478, %v447
  %v480 = vadd.f32 %v479, %v448
  %v481 = vadd.f32 %v480, %v449
  %v482 = vadd.f32 %v481, %v450
  %v483 = vadd.f32 %v482, %v451
  %v484 = vadd.f32 %v483, %v452
  %v485 = vadd.f32 %v484, %v453
  %486 = vadd.xlane.f32.xlu0 %v485
  %v487 = vpop.xlane.xlu0 %486
  %v488 = vmul.f32 %v404, %v470
  %v489 = vmul.f32 %v421, %v487
  %v490 = vmax.f32 %v488, 1e-18
  %v491 = vmax.f32 %v489, 1e-18
  %v492 = vrsqrt.pop %v490
  %v493 = vrsqrt.pop %v491
  %vm494 = vcmp.gt.f32.partialorder %v488, 0.0
  %vm495 = vcmp.gt.f32.partialorder %v489, 0.0
  %v496 = vmul.f32 %v338, %v492
  %v497 = vmul.f32 %v355, %v493
  %v498 = vsel %vm494, %v496, 0.0
  %v499 = vsel %vm495, %v497, 0.0
  %v500 = vadd.f32 %v498, 0.0
  %v501 = vadd.f32 %v499, 0.0
  %v502 = vld [vmem:[%s0 + $0x40] sm:$0xff]
  %v503 = vld [vmem:[%s0 + $0x48] sm:$0xff]
  %v504 = vld [vmem:[%s0 + $0x50] sm:$0xff]
  %v505 = vld [vmem:[%s0 + $0x58] sm:$0xff]
  %v506 = vld [vmem:[%s0 + $0x60] sm:$0xff]
  %v507 = vld [vmem:[%s0 + $0x68] sm:$0xff]
  %v508 = vld [vmem:[%s0 + $0x70] sm:$0xff]
  %v509 = vld [vmem:[%s0 + $0x78] sm:$0xff]
  %v510 = vld [vmem:[%s0 + $0x140] sm:$0xff]
  %v511 = vld [vmem:[%s0 + $0x148] sm:$0xff]
  %v512 = vld [vmem:[%s0 + $0x150] sm:$0xff]
  %v513 = vld [vmem:[%s0 + $0x158] sm:$0xff]
  %v514 = vld [vmem:[%s0 + $0x160] sm:$0xff]
  %v515 = vld [vmem:[%s0 + $0x168] sm:$0xff]
  %v516 = vld [vmem:[%s0 + $0x170] sm:$0xff]
  %v517 = vld [vmem:[%s0 + $0x178] sm:$0xff]
  %v518 = vunpack.c.l.bf16 %v502
  %v519 = vunpack.c.h.bf16 %v502
  %v520 = vunpack.c.l.bf16 %v503
  %v521 = vunpack.c.h.bf16 %v503
  %v522 = vunpack.c.l.bf16 %v504
  %v523 = vunpack.c.h.bf16 %v504
  %v524 = vunpack.c.l.bf16 %v505
  %v525 = vunpack.c.h.bf16 %v505
  %v526 = vunpack.c.l.bf16 %v506
  %v527 = vunpack.c.h.bf16 %v506
  %v528 = vunpack.c.l.bf16 %v507
  %v529 = vunpack.c.h.bf16 %v507
  %v530 = vunpack.c.l.bf16 %v508
  %v531 = vunpack.c.h.bf16 %v508
  %v532 = vunpack.c.l.bf16 %v509
  %v533 = vunpack.c.h.bf16 %v509
  %v534 = vunpack.c.l.bf16 %v510
  %v535 = vunpack.c.h.bf16 %v510
  %v536 = vunpack.c.l.bf16 %v511
  %v537 = vunpack.c.h.bf16 %v511
  %v538 = vunpack.c.l.bf16 %v512
  %v539 = vunpack.c.h.bf16 %v512
  %v540 = vunpack.c.l.bf16 %v513
  %v541 = vunpack.c.h.bf16 %v513
  %v542 = vunpack.c.l.bf16 %v514
  %v543 = vunpack.c.h.bf16 %v514
  %v544 = vunpack.c.l.bf16 %v515
  %v545 = vunpack.c.h.bf16 %v515
  %v546 = vunpack.c.l.bf16 %v516
  %v547 = vunpack.c.h.bf16 %v516
  %v548 = vunpack.c.l.bf16 %v517
  %v549 = vunpack.c.h.bf16 %v517
  %v550 = vld [vmem:[%s1 + $0x40] sm:$0xff]
  %v551 = vld [vmem:[%s1 + $0x48] sm:$0xff]
  %v552 = vld [vmem:[%s1 + $0x50] sm:$0xff]
  %v553 = vld [vmem:[%s1 + $0x58] sm:$0xff]
  %v554 = vld [vmem:[%s1 + $0x60] sm:$0xff]
  %v555 = vld [vmem:[%s1 + $0x68] sm:$0xff]
  %v556 = vld [vmem:[%s1 + $0x70] sm:$0xff]
  %v557 = vld [vmem:[%s1 + $0x78] sm:$0xff]
  %v558 = vld [vmem:[%s1 + $0x140] sm:$0xff]
  %v559 = vld [vmem:[%s1 + $0x148] sm:$0xff]
  %v560 = vld [vmem:[%s1 + $0x150] sm:$0xff]
  %v561 = vld [vmem:[%s1 + $0x158] sm:$0xff]
  %v562 = vld [vmem:[%s1 + $0x160] sm:$0xff]
  %v563 = vld [vmem:[%s1 + $0x168] sm:$0xff]
  %v564 = vld [vmem:[%s1 + $0x170] sm:$0xff]
  %v565 = vld [vmem:[%s1 + $0x178] sm:$0xff]
  %v566 = vunpack.c.l.bf16 %v550
  %v567 = vunpack.c.h.bf16 %v550
  %v568 = vunpack.c.l.bf16 %v551
  %v569 = vunpack.c.h.bf16 %v551
  %v570 = vunpack.c.l.bf16 %v552
  %v571 = vunpack.c.h.bf16 %v552
  %v572 = vunpack.c.l.bf16 %v553
  %v573 = vunpack.c.h.bf16 %v553
  %v574 = vunpack.c.l.bf16 %v554
  %v575 = vunpack.c.h.bf16 %v554
  %v576 = vunpack.c.l.bf16 %v555
  %v577 = vunpack.c.h.bf16 %v555
  %v578 = vunpack.c.l.bf16 %v556
  %v579 = vunpack.c.h.bf16 %v556
  %v580 = vunpack.c.l.bf16 %v557
  %v581 = vunpack.c.h.bf16 %v557
  %v582 = vunpack.c.l.bf16 %v558
  %v583 = vunpack.c.h.bf16 %v558
  %v584 = vunpack.c.l.bf16 %v559
  %v585 = vunpack.c.h.bf16 %v559
  %v586 = vunpack.c.l.bf16 %v560
  %v587 = vunpack.c.h.bf16 %v560
  %v588 = vunpack.c.l.bf16 %v561
  %v589 = vunpack.c.h.bf16 %v561
  %v590 = vunpack.c.l.bf16 %v562
  %v591 = vunpack.c.h.bf16 %v562
  %v592 = vunpack.c.l.bf16 %v563
  %v593 = vunpack.c.h.bf16 %v563
  %v594 = vunpack.c.l.bf16 %v564
  %v595 = vunpack.c.h.bf16 %v564
  %v596 = vunpack.c.l.bf16 %v565
  %v597 = vunpack.c.h.bf16 %v565
  %v598 = vld [vmem:[%s2 + $0x10] sm:$0xff]
  %v599 = vld [vmem:[%s2 + $0x18] sm:$0xff]
  %v602 = vlaneseq
  %v603 = vshrl.u32 %v602, 7
  %v604 = vsub.s32 0, %v603
  %v605 = vrot.slane %v598, %v604
  %v606 = vlaneseq
  %v607 = vshrl.u32 %v606, 7
  %v608 = vsub.s32 1, %v607
  %v609 = vrot.slane %v598, %v608
  %v610 = vlaneseq
  %v611 = vshrl.u32 %v610, 7
  %v612 = vsub.s32 2, %v611
  %v613 = vrot.slane %v598, %v612
  %v614 = vlaneseq
  %v615 = vshrl.u32 %v614, 7
  %v616 = vsub.s32 3, %v615
  %v617 = vrot.slane %v598, %v616
  %v618 = vlaneseq
  %v619 = vshrl.u32 %v618, 7
  %v620 = vsub.s32 4, %v619
  %v621 = vrot.slane %v598, %v620
  %v622 = vlaneseq
  %v623 = vshrl.u32 %v622, 7
  %v624 = vsub.s32 5, %v623
  %v625 = vrot.slane %v598, %v624
  %v626 = vlaneseq
  %v627 = vshrl.u32 %v626, 7
  %v628 = vsub.s32 6, %v627
  %v629 = vrot.slane %v598, %v628
  %v630 = vlaneseq
  %v631 = vshrl.u32 %v630, 7
  %v632 = vsub.s32 7, %v631
  %v633 = vrot.slane %v598, %v632
  %v634 = vlaneseq
  %v635 = vshrl.u32 %v634, 7
  %v636 = vsub.s32 0, %v635
  %v637 = vrot.slane %v599, %v636
  %v638 = vlaneseq
  %v639 = vshrl.u32 %v638, 7
  %v640 = vsub.s32 1, %v639
  %v641 = vrot.slane %v599, %v640
  %v642 = vlaneseq
  %v643 = vshrl.u32 %v642, 7
  %v644 = vsub.s32 2, %v643
  %v645 = vrot.slane %v599, %v644
  %v646 = vlaneseq
  %v647 = vshrl.u32 %v646, 7
  %v648 = vsub.s32 3, %v647
  %v649 = vrot.slane %v599, %v648
  %v650 = vlaneseq
  %v651 = vshrl.u32 %v650, 7
  %v652 = vsub.s32 4, %v651
  %v653 = vrot.slane %v599, %v652
  %v654 = vlaneseq
  %v655 = vshrl.u32 %v654, 7
  %v656 = vsub.s32 5, %v655
  %v657 = vrot.slane %v599, %v656
  %v658 = vlaneseq
  %v659 = vshrl.u32 %v658, 7
  %v660 = vsub.s32 6, %v659
  %v661 = vrot.slane %v599, %v660
  %v662 = vlaneseq
  %v663 = vshrl.u32 %v662, 7
  %v664 = vsub.s32 7, %v663
  %v665 = vrot.slane %v599, %v664
  %v682 = vmul.f32 %v518, %v605
  %v683 = vmul.f32 %v519, %v609
  %v684 = vmul.f32 %v520, %v613
  %v685 = vmul.f32 %v521, %v617
  %v686 = vmul.f32 %v522, %v621
  %v687 = vmul.f32 %v523, %v625
  %v688 = vmul.f32 %v524, %v629
  %v689 = vmul.f32 %v525, %v633
  %v690 = vmul.f32 %v526, %v637
  %v691 = vmul.f32 %v527, %v641
  %v692 = vmul.f32 %v528, %v645
  %v693 = vmul.f32 %v529, %v649
  %v694 = vmul.f32 %v530, %v653
  %v695 = vmul.f32 %v531, %v657
  %v696 = vmul.f32 %v532, %v661
  %v697 = vmul.f32 %v533, %v665
  %v698 = vmul.f32 %v534, %v605
  %v699 = vmul.f32 %v535, %v609
  %v700 = vmul.f32 %v536, %v613
  %v701 = vmul.f32 %v537, %v617
  %v702 = vmul.f32 %v538, %v621
  %v703 = vmul.f32 %v539, %v625
  %v704 = vmul.f32 %v540, %v629
  %v705 = vmul.f32 %v541, %v633
  %v706 = vmul.f32 %v542, %v637
  %v707 = vmul.f32 %v543, %v641
  %v708 = vmul.f32 %v544, %v645
  %v709 = vmul.f32 %v545, %v649
  %v710 = vmul.f32 %v546, %v653
  %v711 = vmul.f32 %v547, %v657
  %v712 = vmul.f32 %v548, %v661
  %v713 = vmul.f32 %v549, %v665
  %v714 = vmul.f32 %v566, %v605
  %v715 = vmul.f32 %v567, %v609
  %v716 = vmul.f32 %v568, %v613
  %v717 = vmul.f32 %v569, %v617
  %v718 = vmul.f32 %v570, %v621
  %v719 = vmul.f32 %v571, %v625
  %v720 = vmul.f32 %v572, %v629
  %v721 = vmul.f32 %v573, %v633
  %v722 = vmul.f32 %v574, %v637
  %v723 = vmul.f32 %v575, %v641
  %v724 = vmul.f32 %v576, %v645
  %v725 = vmul.f32 %v577, %v649
  %v726 = vmul.f32 %v578, %v653
  %v727 = vmul.f32 %v579, %v657
  %v728 = vmul.f32 %v580, %v661
  %v729 = vmul.f32 %v581, %v665
  %v730 = vmul.f32 %v582, %v605
  %v731 = vmul.f32 %v583, %v609
  %v732 = vmul.f32 %v584, %v613
  %v733 = vmul.f32 %v585, %v617
  %v734 = vmul.f32 %v586, %v621
  %v735 = vmul.f32 %v587, %v625
  %v736 = vmul.f32 %v588, %v629
  %v737 = vmul.f32 %v589, %v633
  %v738 = vmul.f32 %v590, %v637
  %v739 = vmul.f32 %v591, %v641
  %v740 = vmul.f32 %v592, %v645
  %v741 = vmul.f32 %v593, %v649
  %v742 = vmul.f32 %v594, %v653
  %v743 = vmul.f32 %v595, %v657
  %v744 = vmul.f32 %v596, %v661
  %v745 = vmul.f32 %v597, %v665
  %v746 = vmin.f32 %v682, %v714
  %v747 = vmin.f32 %v683, %v715
  %v748 = vmin.f32 %v684, %v716
  %v749 = vmin.f32 %v685, %v717
  %v750 = vmin.f32 %v686, %v718
  %v751 = vmin.f32 %v687, %v719
  %v752 = vmin.f32 %v688, %v720
  %v753 = vmin.f32 %v689, %v721
  %v754 = vmin.f32 %v690, %v722
  %v755 = vmin.f32 %v691, %v723
  %v756 = vmin.f32 %v692, %v724
  %v757 = vmin.f32 %v693, %v725
  %v758 = vmin.f32 %v694, %v726
  %v759 = vmin.f32 %v695, %v727
  %v760 = vmin.f32 %v696, %v728
  %v761 = vmin.f32 %v697, %v729
  %v762 = vmin.f32 %v698, %v730
  %v763 = vmin.f32 %v699, %v731
  %v764 = vmin.f32 %v700, %v732
  %v765 = vmin.f32 %v701, %v733
  %v766 = vmin.f32 %v702, %v734
  %v767 = vmin.f32 %v703, %v735
  %v768 = vmin.f32 %v704, %v736
  %v769 = vmin.f32 %v705, %v737
  %v770 = vmin.f32 %v706, %v738
  %v771 = vmin.f32 %v707, %v739
  %v772 = vmin.f32 %v708, %v740
  %v773 = vmin.f32 %v709, %v741
  %v774 = vmin.f32 %v710, %v742
  %v775 = vmin.f32 %v711, %v743
  %v776 = vmin.f32 %v712, %v744
  %v777 = vmin.f32 %v713, %v745
  %v778 = vmul.f32 %v746, %v714
  %v779 = vmul.f32 %v747, %v715
  %v780 = vmul.f32 %v748, %v716
  %v781 = vmul.f32 %v749, %v717
  %v782 = vmul.f32 %v750, %v718
  %v783 = vmul.f32 %v751, %v719
  %v784 = vmul.f32 %v752, %v720
  %v785 = vmul.f32 %v753, %v721
  %v786 = vmul.f32 %v754, %v722
  %v787 = vmul.f32 %v755, %v723
  %v788 = vmul.f32 %v756, %v724
  %v789 = vmul.f32 %v757, %v725
  %v790 = vmul.f32 %v758, %v726
  %v791 = vmul.f32 %v759, %v727
  %v792 = vmul.f32 %v760, %v728
  %v793 = vmul.f32 %v761, %v729
  %v794 = vmul.f32 %v762, %v730
  %v795 = vmul.f32 %v763, %v731
  %v796 = vmul.f32 %v764, %v732
  %v797 = vmul.f32 %v765, %v733
  %v798 = vmul.f32 %v766, %v734
  %v799 = vmul.f32 %v767, %v735
  %v800 = vmul.f32 %v768, %v736
  %v801 = vmul.f32 %v769, %v737
  %v802 = vmul.f32 %v770, %v738
  %v803 = vmul.f32 %v771, %v739
  %v804 = vmul.f32 %v772, %v740
  %v805 = vmul.f32 %v773, %v741
  %v806 = vmul.f32 %v774, %v742
  %v807 = vmul.f32 %v775, %v743
  %v808 = vmul.f32 %v776, %v744
  %v809 = vmul.f32 %v777, %v745
  %v810 = vadd.f32 %v778, %v779
  %v811 = vadd.f32 %v810, %v780
  %v812 = vadd.f32 %v811, %v781
  %v813 = vadd.f32 %v812, %v782
  %v814 = vadd.f32 %v813, %v783
  %v815 = vadd.f32 %v814, %v784
  %v816 = vadd.f32 %v815, %v785
  %v817 = vadd.f32 %v816, %v786
  %v818 = vadd.f32 %v817, %v787
  %v819 = vadd.f32 %v818, %v788
  %v820 = vadd.f32 %v819, %v789
  %v821 = vadd.f32 %v820, %v790
  %v822 = vadd.f32 %v821, %v791
  %v823 = vadd.f32 %v822, %v792
  %v824 = vadd.f32 %v823, %v793
  %825 = vadd.xlane.f32.xlu0 %v824
  %v826 = vpop.xlane.xlu0 %825
  %v827 = vadd.f32 %v794, %v795
  %v828 = vadd.f32 %v827, %v796
  %v829 = vadd.f32 %v828, %v797
  %v830 = vadd.f32 %v829, %v798
  %v831 = vadd.f32 %v830, %v799
  %v832 = vadd.f32 %v831, %v800
  %v833 = vadd.f32 %v832, %v801
  %v834 = vadd.f32 %v833, %v802
  %v835 = vadd.f32 %v834, %v803
  %v836 = vadd.f32 %v835, %v804
  %v837 = vadd.f32 %v836, %v805
  %v838 = vadd.f32 %v837, %v806
  %v839 = vadd.f32 %v838, %v807
  %v840 = vadd.f32 %v839, %v808
  %v841 = vadd.f32 %v840, %v809
  %842 = vadd.xlane.f32.xlu0 %v841
  %v843 = vpop.xlane.xlu0 %842
  %v844 = vmul.f32 %v682, %v682
  %v845 = vmul.f32 %v683, %v683
  %v846 = vmul.f32 %v684, %v684
  %v847 = vmul.f32 %v685, %v685
  %v848 = vmul.f32 %v686, %v686
  %v849 = vmul.f32 %v687, %v687
  %v850 = vmul.f32 %v688, %v688
  %v851 = vmul.f32 %v689, %v689
  %v852 = vmul.f32 %v690, %v690
  %v853 = vmul.f32 %v691, %v691
  %v854 = vmul.f32 %v692, %v692
  %v855 = vmul.f32 %v693, %v693
  %v856 = vmul.f32 %v694, %v694
  %v857 = vmul.f32 %v695, %v695
  %v858 = vmul.f32 %v696, %v696
  %v859 = vmul.f32 %v697, %v697
  %v860 = vmul.f32 %v698, %v698
  %v861 = vmul.f32 %v699, %v699
  %v862 = vmul.f32 %v700, %v700
  %v863 = vmul.f32 %v701, %v701
  %v864 = vmul.f32 %v702, %v702
  %v865 = vmul.f32 %v703, %v703
  %v866 = vmul.f32 %v704, %v704
  %v867 = vmul.f32 %v705, %v705
  %v868 = vmul.f32 %v706, %v706
  %v869 = vmul.f32 %v707, %v707
  %v870 = vmul.f32 %v708, %v708
  %v871 = vmul.f32 %v709, %v709
  %v872 = vmul.f32 %v710, %v710
  %v873 = vmul.f32 %v711, %v711
  %v874 = vmul.f32 %v712, %v712
  %v875 = vmul.f32 %v713, %v713
  %v876 = vadd.f32 %v844, %v845
  %v877 = vadd.f32 %v876, %v846
  %v878 = vadd.f32 %v877, %v847
  %v879 = vadd.f32 %v878, %v848
  %v880 = vadd.f32 %v879, %v849
  %v881 = vadd.f32 %v880, %v850
  %v882 = vadd.f32 %v881, %v851
  %v883 = vadd.f32 %v882, %v852
  %v884 = vadd.f32 %v883, %v853
  %v885 = vadd.f32 %v884, %v854
  %v886 = vadd.f32 %v885, %v855
  %v887 = vadd.f32 %v886, %v856
  %v888 = vadd.f32 %v887, %v857
  %v889 = vadd.f32 %v888, %v858
  %v890 = vadd.f32 %v889, %v859
  %891 = vadd.xlane.f32.xlu0 %v890
  %v892 = vpop.xlane.xlu0 %891
  %v893 = vadd.f32 %v860, %v861
  %v894 = vadd.f32 %v893, %v862
  %v895 = vadd.f32 %v894, %v863
  %v896 = vadd.f32 %v895, %v864
  %v897 = vadd.f32 %v896, %v865
  %v898 = vadd.f32 %v897, %v866
  %v899 = vadd.f32 %v898, %v867
  %v900 = vadd.f32 %v899, %v868
  %v901 = vadd.f32 %v900, %v869
  %v902 = vadd.f32 %v901, %v870
  %v903 = vadd.f32 %v902, %v871
  %v904 = vadd.f32 %v903, %v872
  %v905 = vadd.f32 %v904, %v873
  %v906 = vadd.f32 %v905, %v874
  %v907 = vadd.f32 %v906, %v875
  %908 = vadd.xlane.f32.xlu0 %v907
  %v909 = vpop.xlane.xlu0 %908
  %v910 = vmul.f32 %v714, %v714
  %v911 = vmul.f32 %v715, %v715
  %v912 = vmul.f32 %v716, %v716
  %v913 = vmul.f32 %v717, %v717
  %v914 = vmul.f32 %v718, %v718
  %v915 = vmul.f32 %v719, %v719
  %v916 = vmul.f32 %v720, %v720
  %v917 = vmul.f32 %v721, %v721
  %v918 = vmul.f32 %v722, %v722
  %v919 = vmul.f32 %v723, %v723
  %v920 = vmul.f32 %v724, %v724
  %v921 = vmul.f32 %v725, %v725
  %v922 = vmul.f32 %v726, %v726
  %v923 = vmul.f32 %v727, %v727
  %v924 = vmul.f32 %v728, %v728
  %v925 = vmul.f32 %v729, %v729
  %v926 = vmul.f32 %v730, %v730
  %v927 = vmul.f32 %v731, %v731
  %v928 = vmul.f32 %v732, %v732
  %v929 = vmul.f32 %v733, %v733
  %v930 = vmul.f32 %v734, %v734
  %v931 = vmul.f32 %v735, %v735
  %v932 = vmul.f32 %v736, %v736
  %v933 = vmul.f32 %v737, %v737
  %v934 = vmul.f32 %v738, %v738
  %v935 = vmul.f32 %v739, %v739
  %v936 = vmul.f32 %v740, %v740
  %v937 = vmul.f32 %v741, %v741
  %v938 = vmul.f32 %v742, %v742
  %v939 = vmul.f32 %v743, %v743
  %v940 = vmul.f32 %v744, %v744
  %v941 = vmul.f32 %v745, %v745
  %v942 = vadd.f32 %v910, %v911
  %v943 = vadd.f32 %v942, %v912
  %v944 = vadd.f32 %v943, %v913
  %v945 = vadd.f32 %v944, %v914
  %v946 = vadd.f32 %v945, %v915
  %v947 = vadd.f32 %v946, %v916
  %v948 = vadd.f32 %v947, %v917
  %v949 = vadd.f32 %v948, %v918
  %v950 = vadd.f32 %v949, %v919
  %v951 = vadd.f32 %v950, %v920
  %v952 = vadd.f32 %v951, %v921
  %v953 = vadd.f32 %v952, %v922
  %v954 = vadd.f32 %v953, %v923
  %v955 = vadd.f32 %v954, %v924
  %v956 = vadd.f32 %v955, %v925
  %957 = vadd.xlane.f32.xlu0 %v956
  %v958 = vpop.xlane.xlu0 %957
  %v959 = vadd.f32 %v926, %v927
  %v960 = vadd.f32 %v959, %v928
  %v961 = vadd.f32 %v960, %v929
  %v962 = vadd.f32 %v961, %v930
  %v963 = vadd.f32 %v962, %v931
  %v964 = vadd.f32 %v963, %v932
  %v965 = vadd.f32 %v964, %v933
  %v966 = vadd.f32 %v965, %v934
  %v967 = vadd.f32 %v966, %v935
  %v968 = vadd.f32 %v967, %v936
  %v969 = vadd.f32 %v968, %v937
  %v970 = vadd.f32 %v969, %v938
  %v971 = vadd.f32 %v970, %v939
  %v972 = vadd.f32 %v971, %v940
  %v973 = vadd.f32 %v972, %v941
  %974 = vadd.xlane.f32.xlu0 %v973
  %v975 = vpop.xlane.xlu0 %974
  %v976 = vmul.f32 %v892, %v958
  %v977 = vmul.f32 %v909, %v975
  %v978 = vmax.f32 %v976, 1e-18
  %v979 = vmax.f32 %v977, 1e-18
  %v980 = vrsqrt.pop %v978
  %v981 = vrsqrt.pop %v979
  %vm982 = vcmp.gt.f32.partialorder %v976, 0.0
  %vm983 = vcmp.gt.f32.partialorder %v977, 0.0
  %v984 = vmul.f32 %v826, %v980
  %v985 = vmul.f32 %v843, %v981
  %v986 = vsel %vm982, %v984, 0.0
  %v987 = vsel %vm983, %v985, 0.0
  %v988 = vadd.f32 %v500, %v986
  %v989 = vadd.f32 %v501, %v987
  %v990 = vadd.f32 %v518, %v519
  %v991 = vadd.f32 %v990, %v520
  %v992 = vadd.f32 %v991, %v521
  %v993 = vadd.f32 %v992, %v522
  %v994 = vadd.f32 %v993, %v523
  %v995 = vadd.f32 %v994, %v524
  %v996 = vadd.f32 %v995, %v525
  %v997 = vadd.f32 %v996, %v526
  %v998 = vadd.f32 %v997, %v527
  %v999 = vadd.f32 %v998, %v528
  %v1000 = vadd.f32 %v999, %v529
  %v1001 = vadd.f32 %v1000, %v530
  %v1002 = vadd.f32 %v1001, %v531
  %v1003 = vadd.f32 %v1002, %v532
  %v1004 = vadd.f32 %v1003, %v533
  %1005 = vadd.xlane.f32.xlu0 %v1004
  %v1006 = vpop.xlane.xlu0 %1005
  %v1007 = vadd.f32 %v534, %v535
  %v1008 = vadd.f32 %v1007, %v536
  %v1009 = vadd.f32 %v1008, %v537
  %v1010 = vadd.f32 %v1009, %v538
  %v1011 = vadd.f32 %v1010, %v539
  %v1012 = vadd.f32 %v1011, %v540
  %v1013 = vadd.f32 %v1012, %v541
  %v1014 = vadd.f32 %v1013, %v542
  %v1015 = vadd.f32 %v1014, %v543
  %v1016 = vadd.f32 %v1015, %v544
  %v1017 = vadd.f32 %v1016, %v545
  %v1018 = vadd.f32 %v1017, %v546
  %v1019 = vadd.f32 %v1018, %v547
  %v1020 = vadd.f32 %v1019, %v548
  %v1021 = vadd.f32 %v1020, %v549
  %1022 = vadd.xlane.f32.xlu0 %v1021
  %v1023 = vpop.xlane.xlu0 %1022
  %v1024 = vadd.f32 %v566, %v567
  %v1025 = vadd.f32 %v1024, %v568
  %v1026 = vadd.f32 %v1025, %v569
  %v1027 = vadd.f32 %v1026, %v570
  %v1028 = vadd.f32 %v1027, %v571
  %v1029 = vadd.f32 %v1028, %v572
  %v1030 = vadd.f32 %v1029, %v573
  %v1031 = vadd.f32 %v1030, %v574
  %v1032 = vadd.f32 %v1031, %v575
  %v1033 = vadd.f32 %v1032, %v576
  %v1034 = vadd.f32 %v1033, %v577
  %v1035 = vadd.f32 %v1034, %v578
  %v1036 = vadd.f32 %v1035, %v579
  %v1037 = vadd.f32 %v1036, %v580
  %v1038 = vadd.f32 %v1037, %v581
  %1039 = vadd.xlane.f32.xlu0 %v1038
  %v1040 = vpop.xlane.xlu0 %1039
  %v1041 = vadd.f32 %v582, %v583
  %v1042 = vadd.f32 %v1041, %v584
  %v1043 = vadd.f32 %v1042, %v585
  %v1044 = vadd.f32 %v1043, %v586
  %v1045 = vadd.f32 %v1044, %v587
  %v1046 = vadd.f32 %v1045, %v588
  %v1047 = vadd.f32 %v1046, %v589
  %v1048 = vadd.f32 %v1047, %v590
  %v1049 = vadd.f32 %v1048, %v591
  %v1050 = vadd.f32 %v1049, %v592
  %v1051 = vadd.f32 %v1050, %v593
  %v1052 = vadd.f32 %v1051, %v594
  %v1053 = vadd.f32 %v1052, %v595
  %v1054 = vadd.f32 %v1053, %v596
  %v1055 = vadd.f32 %v1054, %v597
  %1056 = vadd.xlane.f32.xlu0 %v1055
  %v1057 = vpop.xlane.xlu0 %1056
  %v1058 = vld [vmem:[%s0 + $0x80] sm:$0xff]
  %v1059 = vld [vmem:[%s0 + $0x88] sm:$0xff]
  %v1060 = vld [vmem:[%s0 + $0x90] sm:$0xff]
  %v1061 = vld [vmem:[%s0 + $0x98] sm:$0xff]
  %v1062 = vld [vmem:[%s0 + $0xa0] sm:$0xff]
  %v1063 = vld [vmem:[%s0 + $0xa8] sm:$0xff]
  %v1064 = vld [vmem:[%s0 + $0xb0] sm:$0xff]
  %v1065 = vld [vmem:[%s0 + $0xb8] sm:$0xff]
  %v1066 = vld [vmem:[%s0 + $0x180] sm:$0xff]
  %v1067 = vld [vmem:[%s0 + $0x188] sm:$0xff]
  %v1068 = vld [vmem:[%s0 + $0x190] sm:$0xff]
  %v1069 = vld [vmem:[%s0 + $0x198] sm:$0xff]
  %v1070 = vld [vmem:[%s0 + $0x1a0] sm:$0xff]
  %v1071 = vld [vmem:[%s0 + $0x1a8] sm:$0xff]
  %v1072 = vld [vmem:[%s0 + $0x1b0] sm:$0xff]
  %v1073 = vld [vmem:[%s0 + $0x1b8] sm:$0xff]
  %v1074 = vunpack.c.l.bf16 %v1058
  %v1075 = vunpack.c.h.bf16 %v1058
  %v1076 = vunpack.c.l.bf16 %v1059
  %v1077 = vunpack.c.h.bf16 %v1059
  %v1078 = vunpack.c.l.bf16 %v1060
  %v1079 = vunpack.c.h.bf16 %v1060
  %v1080 = vunpack.c.l.bf16 %v1061
  %v1081 = vunpack.c.h.bf16 %v1061
  %v1082 = vunpack.c.l.bf16 %v1062
  %v1083 = vunpack.c.h.bf16 %v1062
  %v1084 = vunpack.c.l.bf16 %v1063
  %v1085 = vunpack.c.h.bf16 %v1063
  %v1086 = vunpack.c.l.bf16 %v1064
  %v1087 = vunpack.c.h.bf16 %v1064
  %v1088 = vunpack.c.l.bf16 %v1065
  %v1089 = vunpack.c.h.bf16 %v1065
  %v1090 = vunpack.c.l.bf16 %v1066
  %v1091 = vunpack.c.h.bf16 %v1066
  %v1092 = vunpack.c.l.bf16 %v1067
  %v1093 = vunpack.c.h.bf16 %v1067
  %v1094 = vunpack.c.l.bf16 %v1068
  %v1095 = vunpack.c.h.bf16 %v1068
  %v1096 = vunpack.c.l.bf16 %v1069
  %v1097 = vunpack.c.h.bf16 %v1069
  %v1098 = vunpack.c.l.bf16 %v1070
  %v1099 = vunpack.c.h.bf16 %v1070
  %v1100 = vunpack.c.l.bf16 %v1071
  %v1101 = vunpack.c.h.bf16 %v1071
  %v1102 = vunpack.c.l.bf16 %v1072
  %v1103 = vunpack.c.h.bf16 %v1072
  %v1104 = vunpack.c.l.bf16 %v1073
  %v1105 = vunpack.c.h.bf16 %v1073
  %v1106 = vld [vmem:[%s1 + $0x80] sm:$0xff]
  %v1107 = vld [vmem:[%s1 + $0x88] sm:$0xff]
  %v1108 = vld [vmem:[%s1 + $0x90] sm:$0xff]
  %v1109 = vld [vmem:[%s1 + $0x98] sm:$0xff]
  %v1110 = vld [vmem:[%s1 + $0xa0] sm:$0xff]
  %v1111 = vld [vmem:[%s1 + $0xa8] sm:$0xff]
  %v1112 = vld [vmem:[%s1 + $0xb0] sm:$0xff]
  %v1113 = vld [vmem:[%s1 + $0xb8] sm:$0xff]
  %v1114 = vld [vmem:[%s1 + $0x180] sm:$0xff]
  %v1115 = vld [vmem:[%s1 + $0x188] sm:$0xff]
  %v1116 = vld [vmem:[%s1 + $0x190] sm:$0xff]
  %v1117 = vld [vmem:[%s1 + $0x198] sm:$0xff]
  %v1118 = vld [vmem:[%s1 + $0x1a0] sm:$0xff]
  %v1119 = vld [vmem:[%s1 + $0x1a8] sm:$0xff]
  %v1120 = vld [vmem:[%s1 + $0x1b0] sm:$0xff]
  %v1121 = vld [vmem:[%s1 + $0x1b8] sm:$0xff]
  %v1122 = vunpack.c.l.bf16 %v1106
  %v1123 = vunpack.c.h.bf16 %v1106
  %v1124 = vunpack.c.l.bf16 %v1107
  %v1125 = vunpack.c.h.bf16 %v1107
  %v1126 = vunpack.c.l.bf16 %v1108
  %v1127 = vunpack.c.h.bf16 %v1108
  %v1128 = vunpack.c.l.bf16 %v1109
  %v1129 = vunpack.c.h.bf16 %v1109
  %v1130 = vunpack.c.l.bf16 %v1110
  %v1131 = vunpack.c.h.bf16 %v1110
  %v1132 = vunpack.c.l.bf16 %v1111
  %v1133 = vunpack.c.h.bf16 %v1111
  %v1134 = vunpack.c.l.bf16 %v1112
  %v1135 = vunpack.c.h.bf16 %v1112
  %v1136 = vunpack.c.l.bf16 %v1113
  %v1137 = vunpack.c.h.bf16 %v1113
  %v1138 = vunpack.c.l.bf16 %v1114
  %v1139 = vunpack.c.h.bf16 %v1114
  %v1140 = vunpack.c.l.bf16 %v1115
  %v1141 = vunpack.c.h.bf16 %v1115
  %v1142 = vunpack.c.l.bf16 %v1116
  %v1143 = vunpack.c.h.bf16 %v1116
  %v1144 = vunpack.c.l.bf16 %v1117
  %v1145 = vunpack.c.h.bf16 %v1117
  %v1146 = vunpack.c.l.bf16 %v1118
  %v1147 = vunpack.c.h.bf16 %v1118
  %v1148 = vunpack.c.l.bf16 %v1119
  %v1149 = vunpack.c.h.bf16 %v1119
  %v1150 = vunpack.c.l.bf16 %v1120
  %v1151 = vunpack.c.h.bf16 %v1120
  %v1152 = vunpack.c.l.bf16 %v1121
  %v1153 = vunpack.c.h.bf16 %v1121
  %v1154 = vld [vmem:[%s2 + $0x20] sm:$0xff]
  %v1155 = vld [vmem:[%s2 + $0x28] sm:$0xff]
  %v1158 = vlaneseq
  %v1159 = vshrl.u32 %v1158, 7
  %v1160 = vsub.s32 0, %v1159
  %v1161 = vrot.slane %v1154, %v1160
  %v1162 = vlaneseq
  %v1163 = vshrl.u32 %v1162, 7
  %v1164 = vsub.s32 1, %v1163
  %v1165 = vrot.slane %v1154, %v1164
  %v1166 = vlaneseq
  %v1167 = vshrl.u32 %v1166, 7
  %v1168 = vsub.s32 2, %v1167
  %v1169 = vrot.slane %v1154, %v1168
  %v1170 = vlaneseq
  %v1171 = vshrl.u32 %v1170, 7
  %v1172 = vsub.s32 3, %v1171
  %v1173 = vrot.slane %v1154, %v1172
  %v1174 = vlaneseq
  %v1175 = vshrl.u32 %v1174, 7
  %v1176 = vsub.s32 4, %v1175
  %v1177 = vrot.slane %v1154, %v1176
  %v1178 = vlaneseq
  %v1179 = vshrl.u32 %v1178, 7
  %v1180 = vsub.s32 5, %v1179
  %v1181 = vrot.slane %v1154, %v1180
  %v1182 = vlaneseq
  %v1183 = vshrl.u32 %v1182, 7
  %v1184 = vsub.s32 6, %v1183
  %v1185 = vrot.slane %v1154, %v1184
  %v1186 = vlaneseq
  %v1187 = vshrl.u32 %v1186, 7
  %v1188 = vsub.s32 7, %v1187
  %v1189 = vrot.slane %v1154, %v1188
  %v1190 = vlaneseq
  %v1191 = vshrl.u32 %v1190, 7
  %v1192 = vsub.s32 0, %v1191
  %v1193 = vrot.slane %v1155, %v1192
  %v1194 = vlaneseq
  %v1195 = vshrl.u32 %v1194, 7
  %v1196 = vsub.s32 1, %v1195
  %v1197 = vrot.slane %v1155, %v1196
  %v1198 = vlaneseq
  %v1199 = vshrl.u32 %v1198, 7
  %v1200 = vsub.s32 2, %v1199
  %v1201 = vrot.slane %v1155, %v1200
  %v1202 = vlaneseq
  %v1203 = vshrl.u32 %v1202, 7
  %v1204 = vsub.s32 3, %v1203
  %v1205 = vrot.slane %v1155, %v1204
  %v1206 = vlaneseq
  %v1207 = vshrl.u32 %v1206, 7
  %v1208 = vsub.s32 4, %v1207
  %v1209 = vrot.slane %v1155, %v1208
  %v1210 = vlaneseq
  %v1211 = vshrl.u32 %v1210, 7
  %v1212 = vsub.s32 5, %v1211
  %v1213 = vrot.slane %v1155, %v1212
  %v1214 = vlaneseq
  %v1215 = vshrl.u32 %v1214, 7
  %v1216 = vsub.s32 6, %v1215
  %v1217 = vrot.slane %v1155, %v1216
  %v1218 = vlaneseq
  %v1219 = vshrl.u32 %v1218, 7
  %v1220 = vsub.s32 7, %v1219
  %v1221 = vrot.slane %v1155, %v1220
  %v1238 = vmul.f32 %v1074, %v1161
  %v1239 = vmul.f32 %v1075, %v1165
  %v1240 = vmul.f32 %v1076, %v1169
  %v1241 = vmul.f32 %v1077, %v1173
  %v1242 = vmul.f32 %v1078, %v1177
  %v1243 = vmul.f32 %v1079, %v1181
  %v1244 = vmul.f32 %v1080, %v1185
  %v1245 = vmul.f32 %v1081, %v1189
  %v1246 = vmul.f32 %v1082, %v1193
  %v1247 = vmul.f32 %v1083, %v1197
  %v1248 = vmul.f32 %v1084, %v1201
  %v1249 = vmul.f32 %v1085, %v1205
  %v1250 = vmul.f32 %v1086, %v1209
  %v1251 = vmul.f32 %v1087, %v1213
  %v1252 = vmul.f32 %v1088, %v1217
  %v1253 = vmul.f32 %v1089, %v1221
  %v1254 = vmul.f32 %v1090, %v1161
  %v1255 = vmul.f32 %v1091, %v1165
  %v1256 = vmul.f32 %v1092, %v1169
  %v1257 = vmul.f32 %v1093, %v1173
  %v1258 = vmul.f32 %v1094, %v1177
  %v1259 = vmul.f32 %v1095, %v1181
  %v1260 = vmul.f32 %v1096, %v1185
  %v1261 = vmul.f32 %v1097, %v1189
  %v1262 = vmul.f32 %v1098, %v1193
  %v1263 = vmul.f32 %v1099, %v1197
  %v1264 = vmul.f32 %v1100, %v1201
  %v1265 = vmul.f32 %v1101, %v1205
  %v1266 = vmul.f32 %v1102, %v1209
  %v1267 = vmul.f32 %v1103, %v1213
  %v1268 = vmul.f32 %v1104, %v1217
  %v1269 = vmul.f32 %v1105, %v1221
  %v1270 = vmul.f32 %v1122, %v1161
  %v1271 = vmul.f32 %v1123, %v1165
  %v1272 = vmul.f32 %v1124, %v1169
  %v1273 = vmul.f32 %v1125, %v1173
  %v1274 = vmul.f32 %v1126, %v1177
  %v1275 = vmul.f32 %v1127, %v1181
  %v1276 = vmul.f32 %v1128, %v1185
  %v1277 = vmul.f32 %v1129, %v1189
  %v1278 = vmul.f32 %v1130, %v1193
  %v1279 = vmul.f32 %v1131, %v1197
  %v1280 = vmul.f32 %v1132, %v1201
  %v1281 = vmul.f32 %v1133, %v1205
  %v1282 = vmul.f32 %v1134, %v1209
  %v1283 = vmul.f32 %v1135, %v1213
  %v1284 = vmul.f32 %v1136, %v1217
  %v1285 = vmul.f32 %v1137, %v1221
  %v1286 = vmul.f32 %v1138, %v1161
  %v1287 = vmul.f32 %v1139, %v1165
  %v1288 = vmul.f32 %v1140, %v1169
  %v1289 = vmul.f32 %v1141, %v1173
  %v1290 = vmul.f32 %v1142, %v1177
  %v1291 = vmul.f32 %v1143, %v1181
  %v1292 = vmul.f32 %v1144, %v1185
  %v1293 = vmul.f32 %v1145, %v1189
  %v1294 = vmul.f32 %v1146, %v1193
  %v1295 = vmul.f32 %v1147, %v1197
  %v1296 = vmul.f32 %v1148, %v1201
  %v1297 = vmul.f32 %v1149, %v1205
  %v1298 = vmul.f32 %v1150, %v1209
  %v1299 = vmul.f32 %v1151, %v1213
  %v1300 = vmul.f32 %v1152, %v1217
  %v1301 = vmul.f32 %v1153, %v1221
  %v1302 = vmin.f32 %v1238, %v1270
  %v1303 = vmin.f32 %v1239, %v1271
  %v1304 = vmin.f32 %v1240, %v1272
  %v1305 = vmin.f32 %v1241, %v1273
  %v1306 = vmin.f32 %v1242, %v1274
  %v1307 = vmin.f32 %v1243, %v1275
  %v1308 = vmin.f32 %v1244, %v1276
  %v1309 = vmin.f32 %v1245, %v1277
  %v1310 = vmin.f32 %v1246, %v1278
  %v1311 = vmin.f32 %v1247, %v1279
  %v1312 = vmin.f32 %v1248, %v1280
  %v1313 = vmin.f32 %v1249, %v1281
  %v1314 = vmin.f32 %v1250, %v1282
  %v1315 = vmin.f32 %v1251, %v1283
  %v1316 = vmin.f32 %v1252, %v1284
  %v1317 = vmin.f32 %v1253, %v1285
  %v1318 = vmin.f32 %v1254, %v1286
  %v1319 = vmin.f32 %v1255, %v1287
  %v1320 = vmin.f32 %v1256, %v1288
  %v1321 = vmin.f32 %v1257, %v1289
  %v1322 = vmin.f32 %v1258, %v1290
  %v1323 = vmin.f32 %v1259, %v1291
  %v1324 = vmin.f32 %v1260, %v1292
  %v1325 = vmin.f32 %v1261, %v1293
  %v1326 = vmin.f32 %v1262, %v1294
  %v1327 = vmin.f32 %v1263, %v1295
  %v1328 = vmin.f32 %v1264, %v1296
  %v1329 = vmin.f32 %v1265, %v1297
  %v1330 = vmin.f32 %v1266, %v1298
  %v1331 = vmin.f32 %v1267, %v1299
  %v1332 = vmin.f32 %v1268, %v1300
  %v1333 = vmin.f32 %v1269, %v1301
  %v1334 = vmul.f32 %v1302, %v1270
  %v1335 = vmul.f32 %v1303, %v1271
  %v1336 = vmul.f32 %v1304, %v1272
  %v1337 = vmul.f32 %v1305, %v1273
  %v1338 = vmul.f32 %v1306, %v1274
  %v1339 = vmul.f32 %v1307, %v1275
  %v1340 = vmul.f32 %v1308, %v1276
  %v1341 = vmul.f32 %v1309, %v1277
  %v1342 = vmul.f32 %v1310, %v1278
  %v1343 = vmul.f32 %v1311, %v1279
  %v1344 = vmul.f32 %v1312, %v1280
  %v1345 = vmul.f32 %v1313, %v1281
  %v1346 = vmul.f32 %v1314, %v1282
  %v1347 = vmul.f32 %v1315, %v1283
  %v1348 = vmul.f32 %v1316, %v1284
  %v1349 = vmul.f32 %v1317, %v1285
  %v1350 = vmul.f32 %v1318, %v1286
  %v1351 = vmul.f32 %v1319, %v1287
  %v1352 = vmul.f32 %v1320, %v1288
  %v1353 = vmul.f32 %v1321, %v1289
  %v1354 = vmul.f32 %v1322, %v1290
  %v1355 = vmul.f32 %v1323, %v1291
  %v1356 = vmul.f32 %v1324, %v1292
  %v1357 = vmul.f32 %v1325, %v1293
  %v1358 = vmul.f32 %v1326, %v1294
  %v1359 = vmul.f32 %v1327, %v1295
  %v1360 = vmul.f32 %v1328, %v1296
  %v1361 = vmul.f32 %v1329, %v1297
  %v1362 = vmul.f32 %v1330, %v1298
  %v1363 = vmul.f32 %v1331, %v1299
  %v1364 = vmul.f32 %v1332, %v1300
  %v1365 = vmul.f32 %v1333, %v1301
  %v1366 = vadd.f32 %v1334, %v1335
  %v1367 = vadd.f32 %v1366, %v1336
  %v1368 = vadd.f32 %v1367, %v1337
  %v1369 = vadd.f32 %v1368, %v1338
  %v1370 = vadd.f32 %v1369, %v1339
  %v1371 = vadd.f32 %v1370, %v1340
  %v1372 = vadd.f32 %v1371, %v1341
  %v1373 = vadd.f32 %v1372, %v1342
  %v1374 = vadd.f32 %v1373, %v1343
  %v1375 = vadd.f32 %v1374, %v1344
  %v1376 = vadd.f32 %v1375, %v1345
  %v1377 = vadd.f32 %v1376, %v1346
  %v1378 = vadd.f32 %v1377, %v1347
  %v1379 = vadd.f32 %v1378, %v1348
  %v1380 = vadd.f32 %v1379, %v1349
  %1381 = vadd.xlane.f32.xlu0 %v1380
  %v1382 = vpop.xlane.xlu0 %1381
  %v1383 = vadd.f32 %v1350, %v1351
  %v1384 = vadd.f32 %v1383, %v1352
  %v1385 = vadd.f32 %v1384, %v1353
  %v1386 = vadd.f32 %v1385, %v1354
  %v1387 = vadd.f32 %v1386, %v1355
  %v1388 = vadd.f32 %v1387, %v1356
  %v1389 = vadd.f32 %v1388, %v1357
  %v1390 = vadd.f32 %v1389, %v1358
  %v1391 = vadd.f32 %v1390, %v1359
  %v1392 = vadd.f32 %v1391, %v1360
  %v1393 = vadd.f32 %v1392, %v1361
  %v1394 = vadd.f32 %v1393, %v1362
  %v1395 = vadd.f32 %v1394, %v1363
  %v1396 = vadd.f32 %v1395, %v1364
  %v1397 = vadd.f32 %v1396, %v1365
  %1398 = vadd.xlane.f32.xlu0 %v1397
  %v1399 = vpop.xlane.xlu0 %1398
  %v1400 = vmul.f32 %v1238, %v1238
  %v1401 = vmul.f32 %v1239, %v1239
  %v1402 = vmul.f32 %v1240, %v1240
  %v1403 = vmul.f32 %v1241, %v1241
  %v1404 = vmul.f32 %v1242, %v1242
  %v1405 = vmul.f32 %v1243, %v1243
  %v1406 = vmul.f32 %v1244, %v1244
  %v1407 = vmul.f32 %v1245, %v1245
  %v1408 = vmul.f32 %v1246, %v1246
  %v1409 = vmul.f32 %v1247, %v1247
  %v1410 = vmul.f32 %v1248, %v1248
  %v1411 = vmul.f32 %v1249, %v1249
  %v1412 = vmul.f32 %v1250, %v1250
  %v1413 = vmul.f32 %v1251, %v1251
  %v1414 = vmul.f32 %v1252, %v1252
  %v1415 = vmul.f32 %v1253, %v1253
  %v1416 = vmul.f32 %v1254, %v1254
  %v1417 = vmul.f32 %v1255, %v1255
  %v1418 = vmul.f32 %v1256, %v1256
  %v1419 = vmul.f32 %v1257, %v1257
  %v1420 = vmul.f32 %v1258, %v1258
  %v1421 = vmul.f32 %v1259, %v1259
  %v1422 = vmul.f32 %v1260, %v1260
  %v1423 = vmul.f32 %v1261, %v1261
  %v1424 = vmul.f32 %v1262, %v1262
  %v1425 = vmul.f32 %v1263, %v1263
  %v1426 = vmul.f32 %v1264, %v1264
  %v1427 = vmul.f32 %v1265, %v1265
  %v1428 = vmul.f32 %v1266, %v1266
  %v1429 = vmul.f32 %v1267, %v1267
  %v1430 = vmul.f32 %v1268, %v1268
  %v1431 = vmul.f32 %v1269, %v1269
  %v1432 = vadd.f32 %v1400, %v1401
  %v1433 = vadd.f32 %v1432, %v1402
  %v1434 = vadd.f32 %v1433, %v1403
  %v1435 = vadd.f32 %v1434, %v1404
  %v1436 = vadd.f32 %v1435, %v1405
  %v1437 = vadd.f32 %v1436, %v1406
  %v1438 = vadd.f32 %v1437, %v1407
  %v1439 = vadd.f32 %v1438, %v1408
  %v1440 = vadd.f32 %v1439, %v1409
  %v1441 = vadd.f32 %v1440, %v1410
  %v1442 = vadd.f32 %v1441, %v1411
  %v1443 = vadd.f32 %v1442, %v1412
  %v1444 = vadd.f32 %v1443, %v1413
  %v1445 = vadd.f32 %v1444, %v1414
  %v1446 = vadd.f32 %v1445, %v1415
  %1447 = vadd.xlane.f32.xlu0 %v1446
  %v1448 = vpop.xlane.xlu0 %1447
  %v1449 = vadd.f32 %v1416, %v1417
  %v1450 = vadd.f32 %v1449, %v1418
  %v1451 = vadd.f32 %v1450, %v1419
  %v1452 = vadd.f32 %v1451, %v1420
  %v1453 = vadd.f32 %v1452, %v1421
  %v1454 = vadd.f32 %v1453, %v1422
  %v1455 = vadd.f32 %v1454, %v1423
  %v1456 = vadd.f32 %v1455, %v1424
  %v1457 = vadd.f32 %v1456, %v1425
  %v1458 = vadd.f32 %v1457, %v1426
  %v1459 = vadd.f32 %v1458, %v1427
  %v1460 = vadd.f32 %v1459, %v1428
  %v1461 = vadd.f32 %v1460, %v1429
  %v1462 = vadd.f32 %v1461, %v1430
  %v1463 = vadd.f32 %v1462, %v1431
  %1464 = vadd.xlane.f32.xlu0 %v1463
  %v1465 = vpop.xlane.xlu0 %1464
  %v1466 = vmul.f32 %v1270, %v1270
  %v1467 = vmul.f32 %v1271, %v1271
  %v1468 = vmul.f32 %v1272, %v1272
  %v1469 = vmul.f32 %v1273, %v1273
  %v1470 = vmul.f32 %v1274, %v1274
  %v1471 = vmul.f32 %v1275, %v1275
  %v1472 = vmul.f32 %v1276, %v1276
  %v1473 = vmul.f32 %v1277, %v1277
  %v1474 = vmul.f32 %v1278, %v1278
  %v1475 = vmul.f32 %v1279, %v1279
  %v1476 = vmul.f32 %v1280, %v1280
  %v1477 = vmul.f32 %v1281, %v1281
  %v1478 = vmul.f32 %v1282, %v1282
  %v1479 = vmul.f32 %v1283, %v1283
  %v1480 = vmul.f32 %v1284, %v1284
  %v1481 = vmul.f32 %v1285, %v1285
  %v1482 = vmul.f32 %v1286, %v1286
  %v1483 = vmul.f32 %v1287, %v1287
  %v1484 = vmul.f32 %v1288, %v1288
  %v1485 = vmul.f32 %v1289, %v1289
  %v1486 = vmul.f32 %v1290, %v1290
  %v1487 = vmul.f32 %v1291, %v1291
  %v1488 = vmul.f32 %v1292, %v1292
  %v1489 = vmul.f32 %v1293, %v1293
  %v1490 = vmul.f32 %v1294, %v1294
  %v1491 = vmul.f32 %v1295, %v1295
  %v1492 = vmul.f32 %v1296, %v1296
  %v1493 = vmul.f32 %v1297, %v1297
  %v1494 = vmul.f32 %v1298, %v1298
  %v1495 = vmul.f32 %v1299, %v1299
  %v1496 = vmul.f32 %v1300, %v1300
  %v1497 = vmul.f32 %v1301, %v1301
  %v1498 = vadd.f32 %v1466, %v1467
  %v1499 = vadd.f32 %v1498, %v1468
  %v1500 = vadd.f32 %v1499, %v1469
  %v1501 = vadd.f32 %v1500, %v1470
  %v1502 = vadd.f32 %v1501, %v1471
  %v1503 = vadd.f32 %v1502, %v1472
  %v1504 = vadd.f32 %v1503, %v1473
  %v1505 = vadd.f32 %v1504, %v1474
  %v1506 = vadd.f32 %v1505, %v1475
  %v1507 = vadd.f32 %v1506, %v1476
  %v1508 = vadd.f32 %v1507, %v1477
  %v1509 = vadd.f32 %v1508, %v1478
  %v1510 = vadd.f32 %v1509, %v1479
  %v1511 = vadd.f32 %v1510, %v1480
  %v1512 = vadd.f32 %v1511, %v1481
  %1513 = vadd.xlane.f32.xlu0 %v1512
  %v1514 = vpop.xlane.xlu0 %1513
  %v1515 = vadd.f32 %v1482, %v1483
  %v1516 = vadd.f32 %v1515, %v1484
  %v1517 = vadd.f32 %v1516, %v1485
  %v1518 = vadd.f32 %v1517, %v1486
  %v1519 = vadd.f32 %v1518, %v1487
  %v1520 = vadd.f32 %v1519, %v1488
  %v1521 = vadd.f32 %v1520, %v1489
  %v1522 = vadd.f32 %v1521, %v1490
  %v1523 = vadd.f32 %v1522, %v1491
  %v1524 = vadd.f32 %v1523, %v1492
  %v1525 = vadd.f32 %v1524, %v1493
  %v1526 = vadd.f32 %v1525, %v1494
  %v1527 = vadd.f32 %v1526, %v1495
  %v1528 = vadd.f32 %v1527, %v1496
  %v1529 = vadd.f32 %v1528, %v1497
  %1530 = vadd.xlane.f32.xlu0 %v1529
  %v1531 = vpop.xlane.xlu0 %1530
  %v1532 = vmul.f32 %v1448, %v1514
  %v1533 = vmul.f32 %v1465, %v1531
  %v1534 = vmax.f32 %v1532, 1e-18
  %v1535 = vmax.f32 %v1533, 1e-18
  %v1536 = vrsqrt.pop %v1534
  %v1537 = vrsqrt.pop %v1535
  %vm1538 = vcmp.gt.f32.partialorder %v1532, 0.0
  %vm1539 = vcmp.gt.f32.partialorder %v1533, 0.0
  %v1540 = vmul.f32 %v1382, %v1536
  %v1541 = vmul.f32 %v1399, %v1537
  %v1542 = vsel %vm1538, %v1540, 0.0
  %v1543 = vsel %vm1539, %v1541, 0.0
  %v1544 = vadd.f32 %v988, %v1542
  %v1545 = vadd.f32 %v989, %v1543
  %v1546 = vld [vmem:[%s0 + $0xc0] sm:$0xff]
  %v1547 = vld [vmem:[%s0 + $0xc8] sm:$0xff]
  %v1548 = vld [vmem:[%s0 + $0xd0] sm:$0xff]
  %v1549 = vld [vmem:[%s0 + $0xd8] sm:$0xff]
  %v1550 = vld [vmem:[%s0 + $0xe0] sm:$0xff]
  %v1551 = vld [vmem:[%s0 + $0xe8] sm:$0xff]
  %v1552 = vld [vmem:[%s0 + $0xf0] sm:$0xff]
  %v1553 = vld [vmem:[%s0 + $0xf8] sm:$0xff]
  %v1554 = vld [vmem:[%s0 + $0x1c0] sm:$0xff]
  %v1555 = vld [vmem:[%s0 + $0x1c8] sm:$0xff]
  %v1556 = vld [vmem:[%s0 + $0x1d0] sm:$0xff]
  %v1557 = vld [vmem:[%s0 + $0x1d8] sm:$0xff]
  %v1558 = vld [vmem:[%s0 + $0x1e0] sm:$0xff]
  %v1559 = vld [vmem:[%s0 + $0x1e8] sm:$0xff]
  %v1560 = vld [vmem:[%s0 + $0x1f0] sm:$0xff]
  %v1561 = vld [vmem:[%s0 + $0x1f8] sm:$0xff]
  %v1562 = vunpack.c.l.bf16 %v1546
  %v1563 = vunpack.c.h.bf16 %v1546
  %v1564 = vunpack.c.l.bf16 %v1547
  %v1565 = vunpack.c.h.bf16 %v1547
  %v1566 = vunpack.c.l.bf16 %v1548
  %v1567 = vunpack.c.h.bf16 %v1548
  %v1568 = vunpack.c.l.bf16 %v1549
  %v1569 = vunpack.c.h.bf16 %v1549
  %v1570 = vunpack.c.l.bf16 %v1550
  %v1571 = vunpack.c.h.bf16 %v1550
  %v1572 = vunpack.c.l.bf16 %v1551
  %v1573 = vunpack.c.h.bf16 %v1551
  %v1574 = vunpack.c.l.bf16 %v1552
  %v1575 = vunpack.c.h.bf16 %v1552
  %v1576 = vunpack.c.l.bf16 %v1553
  %v1577 = vunpack.c.h.bf16 %v1553
  %v1578 = vunpack.c.l.bf16 %v1554
  %v1579 = vunpack.c.h.bf16 %v1554
  %v1580 = vunpack.c.l.bf16 %v1555
  %v1581 = vunpack.c.h.bf16 %v1555
  %v1582 = vunpack.c.l.bf16 %v1556
  %v1583 = vunpack.c.h.bf16 %v1556
  %v1584 = vunpack.c.l.bf16 %v1557
  %v1585 = vunpack.c.h.bf16 %v1557
  %v1586 = vunpack.c.l.bf16 %v1558
  %v1587 = vunpack.c.h.bf16 %v1558
  %v1588 = vunpack.c.l.bf16 %v1559
  %v1589 = vunpack.c.h.bf16 %v1559
  %v1590 = vunpack.c.l.bf16 %v1560
  %v1591 = vunpack.c.h.bf16 %v1560
  %v1592 = vunpack.c.l.bf16 %v1561
  %v1593 = vunpack.c.h.bf16 %v1561
  %v1594 = vld [vmem:[%s1 + $0xc0] sm:$0xff]
  %v1595 = vld [vmem:[%s1 + $0xc8] sm:$0xff]
  %v1596 = vld [vmem:[%s1 + $0xd0] sm:$0xff]
  %v1597 = vld [vmem:[%s1 + $0xd8] sm:$0xff]
  %v1598 = vld [vmem:[%s1 + $0xe0] sm:$0xff]
  %v1599 = vld [vmem:[%s1 + $0xe8] sm:$0xff]
  %v1600 = vld [vmem:[%s1 + $0xf0] sm:$0xff]
  %v1601 = vld [vmem:[%s1 + $0xf8] sm:$0xff]
  %v1602 = vld [vmem:[%s1 + $0x1c0] sm:$0xff]
  %v1603 = vld [vmem:[%s1 + $0x1c8] sm:$0xff]
  %v1604 = vld [vmem:[%s1 + $0x1d0] sm:$0xff]
  %v1605 = vld [vmem:[%s1 + $0x1d8] sm:$0xff]
  %v1606 = vld [vmem:[%s1 + $0x1e0] sm:$0xff]
  %v1607 = vld [vmem:[%s1 + $0x1e8] sm:$0xff]
  %v1608 = vld [vmem:[%s1 + $0x1f0] sm:$0xff]
  %v1609 = vld [vmem:[%s1 + $0x1f8] sm:$0xff]
  %v1610 = vunpack.c.l.bf16 %v1594
  %v1611 = vunpack.c.h.bf16 %v1594
  %v1612 = vunpack.c.l.bf16 %v1595
  %v1613 = vunpack.c.h.bf16 %v1595
  %v1614 = vunpack.c.l.bf16 %v1596
  %v1615 = vunpack.c.h.bf16 %v1596
  %v1616 = vunpack.c.l.bf16 %v1597
  %v1617 = vunpack.c.h.bf16 %v1597
  %v1618 = vunpack.c.l.bf16 %v1598
  %v1619 = vunpack.c.h.bf16 %v1598
  %v1620 = vunpack.c.l.bf16 %v1599
  %v1621 = vunpack.c.h.bf16 %v1599
  %v1622 = vunpack.c.l.bf16 %v1600
  %v1623 = vunpack.c.h.bf16 %v1600
  %v1624 = vunpack.c.l.bf16 %v1601
  %v1625 = vunpack.c.h.bf16 %v1601
  %v1626 = vunpack.c.l.bf16 %v1602
  %v1627 = vunpack.c.h.bf16 %v1602
  %v1628 = vunpack.c.l.bf16 %v1603
  %v1629 = vunpack.c.h.bf16 %v1603
  %v1630 = vunpack.c.l.bf16 %v1604
  %v1631 = vunpack.c.h.bf16 %v1604
  %v1632 = vunpack.c.l.bf16 %v1605
  %v1633 = vunpack.c.h.bf16 %v1605
  %v1634 = vunpack.c.l.bf16 %v1606
  %v1635 = vunpack.c.h.bf16 %v1606
  %v1636 = vunpack.c.l.bf16 %v1607
  %v1637 = vunpack.c.h.bf16 %v1607
  %v1638 = vunpack.c.l.bf16 %v1608
  %v1639 = vunpack.c.h.bf16 %v1608
  %v1640 = vunpack.c.l.bf16 %v1609
  %v1641 = vunpack.c.h.bf16 %v1609
  %v1642 = vld [vmem:[%s2 + $0x30] sm:$0xff]
  %v1643 = vld [vmem:[%s2 + $0x38] sm:$0xff]
  %v1646 = vlaneseq
  %v1647 = vshrl.u32 %v1646, 7
  %v1648 = vsub.s32 0, %v1647
  %v1649 = vrot.slane %v1642, %v1648
  %v1650 = vlaneseq
  %v1651 = vshrl.u32 %v1650, 7
  %v1652 = vsub.s32 1, %v1651
  %v1653 = vrot.slane %v1642, %v1652
  %v1654 = vlaneseq
  %v1655 = vshrl.u32 %v1654, 7
  %v1656 = vsub.s32 2, %v1655
  %v1657 = vrot.slane %v1642, %v1656
  %v1658 = vlaneseq
  %v1659 = vshrl.u32 %v1658, 7
  %v1660 = vsub.s32 3, %v1659
  %v1661 = vrot.slane %v1642, %v1660
  %v1662 = vlaneseq
  %v1663 = vshrl.u32 %v1662, 7
  %v1664 = vsub.s32 4, %v1663
  %v1665 = vrot.slane %v1642, %v1664
  %v1666 = vlaneseq
  %v1667 = vshrl.u32 %v1666, 7
  %v1668 = vsub.s32 5, %v1667
  %v1669 = vrot.slane %v1642, %v1668
  %v1670 = vlaneseq
  %v1671 = vshrl.u32 %v1670, 7
  %v1672 = vsub.s32 6, %v1671
  %v1673 = vrot.slane %v1642, %v1672
  %v1674 = vlaneseq
  %v1675 = vshrl.u32 %v1674, 7
  %v1676 = vsub.s32 7, %v1675
  %v1677 = vrot.slane %v1642, %v1676
  %v1678 = vlaneseq
  %v1679 = vshrl.u32 %v1678, 7
  %v1680 = vsub.s32 0, %v1679
  %v1681 = vrot.slane %v1643, %v1680
  %v1682 = vlaneseq
  %v1683 = vshrl.u32 %v1682, 7
  %v1684 = vsub.s32 1, %v1683
  %v1685 = vrot.slane %v1643, %v1684
  %v1686 = vlaneseq
  %v1687 = vshrl.u32 %v1686, 7
  %v1688 = vsub.s32 2, %v1687
  %v1689 = vrot.slane %v1643, %v1688
  %v1690 = vlaneseq
  %v1691 = vshrl.u32 %v1690, 7
  %v1692 = vsub.s32 3, %v1691
  %v1693 = vrot.slane %v1643, %v1692
  %v1694 = vlaneseq
  %v1695 = vshrl.u32 %v1694, 7
  %v1696 = vsub.s32 4, %v1695
  %v1697 = vrot.slane %v1643, %v1696
  %v1698 = vlaneseq
  %v1699 = vshrl.u32 %v1698, 7
  %v1700 = vsub.s32 5, %v1699
  %v1701 = vrot.slane %v1643, %v1700
  %v1702 = vlaneseq
  %v1703 = vshrl.u32 %v1702, 7
  %v1704 = vsub.s32 6, %v1703
  %v1705 = vrot.slane %v1643, %v1704
  %v1706 = vlaneseq
  %v1707 = vshrl.u32 %v1706, 7
  %v1708 = vsub.s32 7, %v1707
  %v1709 = vrot.slane %v1643, %v1708
  %v1726 = vmul.f32 %v1562, %v1649
  %v1727 = vmul.f32 %v1563, %v1653
  %v1728 = vmul.f32 %v1564, %v1657
  %v1729 = vmul.f32 %v1565, %v1661
  %v1730 = vmul.f32 %v1566, %v1665
  %v1731 = vmul.f32 %v1567, %v1669
  %v1732 = vmul.f32 %v1568, %v1673
  %v1733 = vmul.f32 %v1569, %v1677
  %v1734 = vmul.f32 %v1570, %v1681
  %v1735 = vmul.f32 %v1571, %v1685
  %v1736 = vmul.f32 %v1572, %v1689
  %v1737 = vmul.f32 %v1573, %v1693
  %v1738 = vmul.f32 %v1574, %v1697
  %v1739 = vmul.f32 %v1575, %v1701
  %v1740 = vmul.f32 %v1576, %v1705
  %v1741 = vmul.f32 %v1577, %v1709
  %v1742 = vmul.f32 %v1578, %v1649
  %v1743 = vmul.f32 %v1579, %v1653
  %v1744 = vmul.f32 %v1580, %v1657
  %v1745 = vmul.f32 %v1581, %v1661
  %v1746 = vmul.f32 %v1582, %v1665
  %v1747 = vmul.f32 %v1583, %v1669
  %v1748 = vmul.f32 %v1584, %v1673
  %v1749 = vmul.f32 %v1585, %v1677
  %v1750 = vmul.f32 %v1586, %v1681
  %v1751 = vmul.f32 %v1587, %v1685
  %v1752 = vmul.f32 %v1588, %v1689
  %v1753 = vmul.f32 %v1589, %v1693
  %v1754 = vmul.f32 %v1590, %v1697
  %v1755 = vmul.f32 %v1591, %v1701
  %v1756 = vmul.f32 %v1592, %v1705
  %v1757 = vmul.f32 %v1593, %v1709
  %v1758 = vmul.f32 %v1610, %v1649
  %v1759 = vmul.f32 %v1611, %v1653
  %v1760 = vmul.f32 %v1612, %v1657
  %v1761 = vmul.f32 %v1613, %v1661
  %v1762 = vmul.f32 %v1614, %v1665
  %v1763 = vmul.f32 %v1615, %v1669
  %v1764 = vmul.f32 %v1616, %v1673
  %v1765 = vmul.f32 %v1617, %v1677
  %v1766 = vmul.f32 %v1618, %v1681
  %v1767 = vmul.f32 %v1619, %v1685
  %v1768 = vmul.f32 %v1620, %v1689
  %v1769 = vmul.f32 %v1621, %v1693
  %v1770 = vmul.f32 %v1622, %v1697
  %v1771 = vmul.f32 %v1623, %v1701
  %v1772 = vmul.f32 %v1624, %v1705
  %v1773 = vmul.f32 %v1625, %v1709
  %v1774 = vmul.f32 %v1626, %v1649
  %v1775 = vmul.f32 %v1627, %v1653
  %v1776 = vmul.f32 %v1628, %v1657
  %v1777 = vmul.f32 %v1629, %v1661
  %v1778 = vmul.f32 %v1630, %v1665
  %v1779 = vmul.f32 %v1631, %v1669
  %v1780 = vmul.f32 %v1632, %v1673
  %v1781 = vmul.f32 %v1633, %v1677
  %v1782 = vmul.f32 %v1634, %v1681
  %v1783 = vmul.f32 %v1635, %v1685
  %v1784 = vmul.f32 %v1636, %v1689
  %v1785 = vmul.f32 %v1637, %v1693
  %v1786 = vmul.f32 %v1638, %v1697
  %v1787 = vmul.f32 %v1639, %v1701
  %v1788 = vmul.f32 %v1640, %v1705
  %v1789 = vmul.f32 %v1641, %v1709
  %v1790 = vmin.f32 %v1726, %v1758
  %v1791 = vmin.f32 %v1727, %v1759
  %v1792 = vmin.f32 %v1728, %v1760
  %v1793 = vmin.f32 %v1729, %v1761
  %v1794 = vmin.f32 %v1730, %v1762
  %v1795 = vmin.f32 %v1731, %v1763
  %v1796 = vmin.f32 %v1732, %v1764
  %v1797 = vmin.f32 %v1733, %v1765
  %v1798 = vmin.f32 %v1734, %v1766
  %v1799 = vmin.f32 %v1735, %v1767
  %v1800 = vmin.f32 %v1736, %v1768
  %v1801 = vmin.f32 %v1737, %v1769
  %v1802 = vmin.f32 %v1738, %v1770
  %v1803 = vmin.f32 %v1739, %v1771
  %v1804 = vmin.f32 %v1740, %v1772
  %v1805 = vmin.f32 %v1741, %v1773
  %v1806 = vmin.f32 %v1742, %v1774
  %v1807 = vmin.f32 %v1743, %v1775
  %v1808 = vmin.f32 %v1744, %v1776
  %v1809 = vmin.f32 %v1745, %v1777
  %v1810 = vmin.f32 %v1746, %v1778
  %v1811 = vmin.f32 %v1747, %v1779
  %v1812 = vmin.f32 %v1748, %v1780
  %v1813 = vmin.f32 %v1749, %v1781
  %v1814 = vmin.f32 %v1750, %v1782
  %v1815 = vmin.f32 %v1751, %v1783
  %v1816 = vmin.f32 %v1752, %v1784
  %v1817 = vmin.f32 %v1753, %v1785
  %v1818 = vmin.f32 %v1754, %v1786
  %v1819 = vmin.f32 %v1755, %v1787
  %v1820 = vmin.f32 %v1756, %v1788
  %v1821 = vmin.f32 %v1757, %v1789
  %v1822 = vmul.f32 %v1790, %v1758
  %v1823 = vmul.f32 %v1791, %v1759
  %v1824 = vmul.f32 %v1792, %v1760
  %v1825 = vmul.f32 %v1793, %v1761
  %v1826 = vmul.f32 %v1794, %v1762
  %v1827 = vmul.f32 %v1795, %v1763
  %v1828 = vmul.f32 %v1796, %v1764
  %v1829 = vmul.f32 %v1797, %v1765
  %v1830 = vmul.f32 %v1798, %v1766
  %v1831 = vmul.f32 %v1799, %v1767
  %v1832 = vmul.f32 %v1800, %v1768
  %v1833 = vmul.f32 %v1801, %v1769
  %v1834 = vmul.f32 %v1802, %v1770
  %v1835 = vmul.f32 %v1803, %v1771
  %v1836 = vmul.f32 %v1804, %v1772
  %v1837 = vmul.f32 %v1805, %v1773
  %v1838 = vmul.f32 %v1806, %v1774
  %v1839 = vmul.f32 %v1807, %v1775
  %v1840 = vmul.f32 %v1808, %v1776
  %v1841 = vmul.f32 %v1809, %v1777
  %v1842 = vmul.f32 %v1810, %v1778
  %v1843 = vmul.f32 %v1811, %v1779
  %v1844 = vmul.f32 %v1812, %v1780
  %v1845 = vmul.f32 %v1813, %v1781
  %v1846 = vmul.f32 %v1814, %v1782
  %v1847 = vmul.f32 %v1815, %v1783
  %v1848 = vmul.f32 %v1816, %v1784
  %v1849 = vmul.f32 %v1817, %v1785
  %v1850 = vmul.f32 %v1818, %v1786
  %v1851 = vmul.f32 %v1819, %v1787
  %v1852 = vmul.f32 %v1820, %v1788
  %v1853 = vmul.f32 %v1821, %v1789
  %v1854 = vadd.f32 %v1822, %v1823
  %v1855 = vadd.f32 %v1854, %v1824
  %v1856 = vadd.f32 %v1855, %v1825
  %v1857 = vadd.f32 %v1856, %v1826
  %v1858 = vadd.f32 %v1857, %v1827
  %v1859 = vadd.f32 %v1858, %v1828
  %v1860 = vadd.f32 %v1859, %v1829
  %v1861 = vadd.f32 %v1860, %v1830
  %v1862 = vadd.f32 %v1861, %v1831
  %v1863 = vadd.f32 %v1862, %v1832
  %v1864 = vadd.f32 %v1863, %v1833
  %v1865 = vadd.f32 %v1864, %v1834
  %v1866 = vadd.f32 %v1865, %v1835
  %v1867 = vadd.f32 %v1866, %v1836
  %v1868 = vadd.f32 %v1867, %v1837
  %1869 = vadd.xlane.f32.xlu0 %v1868
  %v1870 = vpop.xlane.xlu0 %1869
  %v1871 = vadd.f32 %v1838, %v1839
  %v1872 = vadd.f32 %v1871, %v1840
  %v1873 = vadd.f32 %v1872, %v1841
  %v1874 = vadd.f32 %v1873, %v1842
  %v1875 = vadd.f32 %v1874, %v1843
  %v1876 = vadd.f32 %v1875, %v1844
  %v1877 = vadd.f32 %v1876, %v1845
  %v1878 = vadd.f32 %v1877, %v1846
  %v1879 = vadd.f32 %v1878, %v1847
  %v1880 = vadd.f32 %v1879, %v1848
  %v1881 = vadd.f32 %v1880, %v1849
  %v1882 = vadd.f32 %v1881, %v1850
  %v1883 = vadd.f32 %v1882, %v1851
  %v1884 = vadd.f32 %v1883, %v1852
  %v1885 = vadd.f32 %v1884, %v1853
  %1886 = vadd.xlane.f32.xlu0 %v1885
  %v1887 = vpop.xlane.xlu0 %1886
  %v1888 = vmul.f32 %v1726, %v1726
  %v1889 = vmul.f32 %v1727, %v1727
  %v1890 = vmul.f32 %v1728, %v1728
  %v1891 = vmul.f32 %v1729, %v1729
  %v1892 = vmul.f32 %v1730, %v1730
  %v1893 = vmul.f32 %v1731, %v1731
  %v1894 = vmul.f32 %v1732, %v1732
  %v1895 = vmul.f32 %v1733, %v1733
  %v1896 = vmul.f32 %v1734, %v1734
  %v1897 = vmul.f32 %v1735, %v1735
  %v1898 = vmul.f32 %v1736, %v1736
  %v1899 = vmul.f32 %v1737, %v1737
  %v1900 = vmul.f32 %v1738, %v1738
  %v1901 = vmul.f32 %v1739, %v1739
  %v1902 = vmul.f32 %v1740, %v1740
  %v1903 = vmul.f32 %v1741, %v1741
  %v1904 = vmul.f32 %v1742, %v1742
  %v1905 = vmul.f32 %v1743, %v1743
  %v1906 = vmul.f32 %v1744, %v1744
  %v1907 = vmul.f32 %v1745, %v1745
  %v1908 = vmul.f32 %v1746, %v1746
  %v1909 = vmul.f32 %v1747, %v1747
  %v1910 = vmul.f32 %v1748, %v1748
  %v1911 = vmul.f32 %v1749, %v1749
  %v1912 = vmul.f32 %v1750, %v1750
  %v1913 = vmul.f32 %v1751, %v1751
  %v1914 = vmul.f32 %v1752, %v1752
  %v1915 = vmul.f32 %v1753, %v1753
  %v1916 = vmul.f32 %v1754, %v1754
  %v1917 = vmul.f32 %v1755, %v1755
  %v1918 = vmul.f32 %v1756, %v1756
  %v1919 = vmul.f32 %v1757, %v1757
  %v1920 = vadd.f32 %v1888, %v1889
  %v1921 = vadd.f32 %v1920, %v1890
  %v1922 = vadd.f32 %v1921, %v1891
  %v1923 = vadd.f32 %v1922, %v1892
  %v1924 = vadd.f32 %v1923, %v1893
  %v1925 = vadd.f32 %v1924, %v1894
  %v1926 = vadd.f32 %v1925, %v1895
  %v1927 = vadd.f32 %v1926, %v1896
  %v1928 = vadd.f32 %v1927, %v1897
  %v1929 = vadd.f32 %v1928, %v1898
  %v1930 = vadd.f32 %v1929, %v1899
  %v1931 = vadd.f32 %v1930, %v1900
  %v1932 = vadd.f32 %v1931, %v1901
  %v1933 = vadd.f32 %v1932, %v1902
  %v1934 = vadd.f32 %v1933, %v1903
  %1935 = vadd.xlane.f32.xlu0 %v1934
  %v1936 = vpop.xlane.xlu0 %1935
  %v1937 = vadd.f32 %v1904, %v1905
  %v1938 = vadd.f32 %v1937, %v1906
  %v1939 = vadd.f32 %v1938, %v1907
  %v1940 = vadd.f32 %v1939, %v1908
  %v1941 = vadd.f32 %v1940, %v1909
  %v1942 = vadd.f32 %v1941, %v1910
  %v1943 = vadd.f32 %v1942, %v1911
  %v1944 = vadd.f32 %v1943, %v1912
  %v1945 = vadd.f32 %v1944, %v1913
  %v1946 = vadd.f32 %v1945, %v1914
  %v1947 = vadd.f32 %v1946, %v1915
  %v1948 = vadd.f32 %v1947, %v1916
  %v1949 = vadd.f32 %v1948, %v1917
  %v1950 = vadd.f32 %v1949, %v1918
  %v1951 = vadd.f32 %v1950, %v1919
  %1952 = vadd.xlane.f32.xlu0 %v1951
  %v1953 = vpop.xlane.xlu0 %1952
  %v1954 = vmul.f32 %v1758, %v1758
  %v1955 = vmul.f32 %v1759, %v1759
  %v1956 = vmul.f32 %v1760, %v1760
  %v1957 = vmul.f32 %v1761, %v1761
  %v1958 = vmul.f32 %v1762, %v1762
  %v1959 = vmul.f32 %v1763, %v1763
  %v1960 = vmul.f32 %v1764, %v1764
  %v1961 = vmul.f32 %v1765, %v1765
  %v1962 = vmul.f32 %v1766, %v1766
  %v1963 = vmul.f32 %v1767, %v1767
  %v1964 = vmul.f32 %v1768, %v1768
  %v1965 = vmul.f32 %v1769, %v1769
  %v1966 = vmul.f32 %v1770, %v1770
  %v1967 = vmul.f32 %v1771, %v1771
  %v1968 = vmul.f32 %v1772, %v1772
  %v1969 = vmul.f32 %v1773, %v1773
  %v1970 = vmul.f32 %v1774, %v1774
  %v1971 = vmul.f32 %v1775, %v1775
  %v1972 = vmul.f32 %v1776, %v1776
  %v1973 = vmul.f32 %v1777, %v1777
  %v1974 = vmul.f32 %v1778, %v1778
  %v1975 = vmul.f32 %v1779, %v1779
  %v1976 = vmul.f32 %v1780, %v1780
  %v1977 = vmul.f32 %v1781, %v1781
  %v1978 = vmul.f32 %v1782, %v1782
  %v1979 = vmul.f32 %v1783, %v1783
  %v1980 = vmul.f32 %v1784, %v1784
  %v1981 = vmul.f32 %v1785, %v1785
  %v1982 = vmul.f32 %v1786, %v1786
  %v1983 = vmul.f32 %v1787, %v1787
  %v1984 = vmul.f32 %v1788, %v1788
  %v1985 = vmul.f32 %v1789, %v1789
  %v1986 = vadd.f32 %v1954, %v1955
  %v1987 = vadd.f32 %v1986, %v1956
  %v1988 = vadd.f32 %v1987, %v1957
  %v1989 = vadd.f32 %v1988, %v1958
  %v1990 = vadd.f32 %v1989, %v1959
  %v1991 = vadd.f32 %v1990, %v1960
  %v1992 = vadd.f32 %v1991, %v1961
  %v1993 = vadd.f32 %v1992, %v1962
  %v1994 = vadd.f32 %v1993, %v1963
  %v1995 = vadd.f32 %v1994, %v1964
  %v1996 = vadd.f32 %v1995, %v1965
  %v1997 = vadd.f32 %v1996, %v1966
  %v1998 = vadd.f32 %v1997, %v1967
  %v1999 = vadd.f32 %v1998, %v1968
  %v2000 = vadd.f32 %v1999, %v1969
  %2001 = vadd.xlane.f32.xlu0 %v2000
  %v2002 = vpop.xlane.xlu0 %2001
  %v2003 = vadd.f32 %v1970, %v1971
  %v2004 = vadd.f32 %v2003, %v1972
  %v2005 = vadd.f32 %v2004, %v1973
  %v2006 = vadd.f32 %v2005, %v1974
  %v2007 = vadd.f32 %v2006, %v1975
  %v2008 = vadd.f32 %v2007, %v1976
  %v2009 = vadd.f32 %v2008, %v1977
  %v2010 = vadd.f32 %v2009, %v1978
  %v2011 = vadd.f32 %v2010, %v1979
  %v2012 = vadd.f32 %v2011, %v1980
  %v2013 = vadd.f32 %v2012, %v1981
  %v2014 = vadd.f32 %v2013, %v1982
  %v2015 = vadd.f32 %v2014, %v1983
  %v2016 = vadd.f32 %v2015, %v1984
  %v2017 = vadd.f32 %v2016, %v1985
  %2018 = vadd.xlane.f32.xlu0 %v2017
  %v2019 = vpop.xlane.xlu0 %2018
  %v2020 = vmul.f32 %v1936, %v2002
  %v2021 = vmul.f32 %v1953, %v2019
  %v2022 = vmax.f32 %v2020, 1e-18
  %v2023 = vmax.f32 %v2021, 1e-18
  %v2024 = vrsqrt.pop %v2022
  %v2025 = vrsqrt.pop %v2023
  %vm2026 = vcmp.gt.f32.partialorder %v2020, 0.0
  %vm2027 = vcmp.gt.f32.partialorder %v2021, 0.0
  %v2028 = vmul.f32 %v1870, %v2024
  %v2029 = vmul.f32 %v1887, %v2025
  %v2030 = vsel %vm2026, %v2028, 0.0
  %v2031 = vsel %vm2027, %v2029, 0.0
  %v2032 = vadd.f32 %v1544, %v2030
  %v2033 = vadd.f32 %v1545, %v2031
  %v2034 = vsub.f32 %v1006, %v1040
  %v2035 = vsub.f32 %v1023, %v1057
  %v2036 = vmul.f32 %v2034, %v2034
  %v2037 = vmul.f32 %v2035, %v2035
  %v2038 = vsub.f32 0.0, %v2036
  %v2039 = vsub.f32 0.0, %v2037
  %v2040 = vrcp.pop 72.0
  %v2041 = vmul.f32 %v2038, %v2040
  %v2042 = vmul.f32 %v2039, %v2040
  %v2043 = vmul.f32 %v2041, 1.442695
  %v2044 = vpow.pop %v2043
  %v2045 = vmul.f32 %v2042, 1.442695
  %v2046 = vpow.pop %v2045
  %v2047 = vmul.f32 %v2032, 2.5
  %v2048 = vmul.f32 %v2033, 2.5
  %v2049 = vmul.f32 %v2047, %v2044
  %v2050 = vmul.f32 %v2048, %v2046
  %2051 = vst [vmem:[%s3] sm:$0xff] %v2049
  %2052 = vst [vmem:[%s3 + $0x8] sm:$0xff] %v2050
  // Predicated region
  $region14: #{cider_d_forward.1} parent=0 // pred_check
    _
  $region15: #{cider_d_forward.1} parent=0 // pred_check_branch
    %2054 = sbr.rel (0) target = $region17
  $region16: #{cider_d_forward.1} parent=0 // pred_region
    _
  $region17: #{cider_d_forward.1} parent=0 // pred_fallthru
    _
  // Predicated region
  $region18: #{cider_d_forward.1} parent=0 // pred_check
    _
  $region19: #{cider_d_forward.1} parent=0 // pred_check_branch
    %2056 = sbr.rel (0) target = $region21
  $region20: #{cider_d_forward.1} parent=0 // pred_region
    _
  $region21: #{cider_d_forward.1} parent=0 // pred_fallthru
    _

</llo_original>
